<compile_context>
chip_gen: v5e
topology: v5e:2x2
jax: 0.10.0
libtpu: 0.0.40
codegen_flags: <defaults>
</compile_context>

<pallas_src>
from functools import partial

import jax
import jax.numpy as jnp
from jax.experimental import pallas as pl
from jax.experimental.pallas import tpu as pltpu

K_SIZE = 3                           # depthwise kernel size
GELU_APPROXIMATE = True              # tanh GELU -> EUP slot (per perf review)
MXU_INPUT_DTYPE = jnp.bfloat16       # bf16 MXU operands, f32 accumulation


def mbconv_kernel(x_ref, wh_ref, wc_ref, out_ref, *, H, W, K, C, se_dim, b_blk):
    HW = H * W
    P = K // 2
    PAD = P * (W + 1)                       # max |tap offset| in flat h*W+w coords
    Hd = wh_ref.shape[0]                    # hidden dim

    # --- unpack the two packed weight operands (static, tiny slices) --------
    wh = wh_ref[...]                        # (Hd, C + 1 + K*K + 1 + 2*se_dim)
    o = 0
    we = wh[:, o:o + C]; o += C             # expand 1x1 weight (BN0/BN1 folded)
    be = wh[:, o:o + 1]; o += 1             # expand bias
    wd = wh[:, o:o + K * K]; o += K * K     # depthwise taps (BN2 scale folded)
    b2 = wh[:, o:o + 1]; o += 1             # depthwise bias
    se1t = wh[:, o:o + se_dim]; o += se_dim  # SE fc1 weight, transposed
    se2 = wh[:, o:o + se_dim]; o += se_dim   # SE fc2 weight
    wc = wc_ref[...]                        # (C, Hd + 1)
    w2 = wc[:, :Hd]                         # project 1x1 weight (BN3 scale folded)
    b3 = wc[:, Hd:Hd + 1]                   # project bias

    we_mxu = we.astype(MXU_INPUT_DTYPE)
    w2_mxu = w2.astype(MXU_INPUT_DTYPE)

    # Column index of each *padded* flat position ((p - PAD) mod W); used to
    # pre-mask the left/right image-edge wrap once per dw (2 selects total).
    colp = (jax.lax.broadcasted_iota(jnp.int32, (1, HW + 2 * PAD), 1) + (W - 1)) % W
    zpad = jnp.zeros((Hd, PAD), jnp.float32)

    for img in range(b_blk):                # B_BLK is small & static
        x = x_ref[img]                      # (C, HW), lane-dense

        # --- 1x1 expand conv + GELU ------------------------------------------
        a1 = jnp.dot(we_mxu, x.astype(MXU_INPUT_DTYPE),
                     preferred_element_type=jnp.float32) + be
        a1 = jax.nn.gelu(a1, approximate=GELU_APPROXIMATE)          # (Hd, HW)

        # --- depthwise KxK "same" conv + bias + GELU --------------------------
        # One flat zero pad supplies the top/bottom edge zeros; the column-wrap
        # pixels are killed by pre-masking the padded source once per dw.
        a1f = jnp.concatenate([zpad, a1, zpad], axis=1)             # (Hd, HW+2*PAD)
        srcs = {}
        for dw in range(-P, P + 1):
            if dw == 0:
                srcs[dw] = a1f
            elif dw < 0:
                srcs[dw] = jnp.where(colp < W + dw, a1f, 0.0)       # zero cols >= W-|dw|
            else:
                srcs[dw] = jnp.where(colp >= dw, a1f, 0.0)          # zero cols <  dw

        acc = jnp.zeros((Hd, HW), jnp.float32)
        for dh in range(-P, P + 1):
            for dw in range(-P, P + 1):
                off = dh * W + dw
                win = srcs[dw][:, PAD + off: PAD + off + HW]        # a1 at (h+dh, w+dw)
                tap = (dh + P) * K + (dw + P)                       # PyTorch (i, j) order
                acc = acc + win * wd[:, tap:tap + 1]
        a2 = jax.nn.gelu(acc + b2, approximate=GELU_APPROXIMATE)    # (Hd, HW)

        # --- Squeeze-and-Excite (tiny FCs as VPU broadcast-MACs) --------------
        pooled = jnp.mean(a2, axis=1, keepdims=True)                # (Hd, 1)
        z = jnp.sum(se1t * pooled, axis=0, keepdims=True)           # (1, se_dim)
        z = jax.nn.gelu(z, approximate=GELU_APPROXIMATE)
        gate = jax.nn.sigmoid(
            jnp.sum(se2 * z, axis=1, keepdims=True))                # (Hd, 1)
        a3 = a2 * gate                                              # per-channel scale

        # --- 1x1 project conv + bias + residual -------------------------------
        y = jnp.dot(w2_mxu, a3.astype(MXU_INPUT_DTYPE),
                    preferred_element_type=jnp.float32) + b3
        out_ref[img] = x + y


@jax.jit
def mbconv_forward(x_nchw, pack_h, pack_c):
    """x_nchw: (B, C, H, W) float32; pack_h/pack_c: host-packed folded weights."""
    B, C, H, W = x_nchw.shape
    HW = H * W
    se_dim = (pack_h.shape[1] - C - 1 - K_SIZE * K_SIZE - 1) // 2
    x = x_nchw.reshape(B, C, HW).astype(jnp.float32)    # free view of NCHW

    # Batch block: amortize per-step overhead while keeping >= 2 parallel grid
    # steps (v7x has 2 TensorCores fed only via a "parallel" grid axis).
    b_blk = 1
    while (b_blk * 2 <= 8 and B % (b_blk * 2) == 0 and B // (b_blk * 2) >= 2):
        b_blk *= 2
    n_steps = B // b_blk

    out = pl.pallas_call(
        partial(mbconv_kernel, H=H, W=W, K=K_SIZE, C=C, se_dim=se_dim, b_blk=b_blk),
        out_shape=jax.ShapeDtypeStruct((B, C, HW), jnp.float32),
        grid_spec=pltpu.PrefetchScalarGridSpec(
            num_scalar_prefetch=0,
            grid=(n_steps,),
            in_specs=[
                pl.BlockSpec((b_blk, C, HW), lambda i: (i, 0, 0)),
                # Packed constants: same block every step (Pallas skips re-DMA).
                pl.BlockSpec(pack_h.shape, lambda i: (0, 0)),
                pl.BlockSpec(pack_c.shape, lambda i: (0, 0)),
            ],
            out_specs=pl.BlockSpec((b_blk, C, HW), lambda i: (i, 0, 0)),
        ),
        input_output_aliases={0: 0},                    # out aliases residual input
        compiler_params=pltpu.CompilerParams(
            dimension_semantics=("parallel",),          # shards steps across v7x TCs
            vmem_limit_bytes=32 * 1024 * 1024,          # explicit (v5e default 16 MiB)
        ),
    )(x, pack_h, pack_c)

    return out.reshape(B, C, H, W)


# ----------------------- parameter construction / folding ---------------------

def make_raw_params(key, inp, oup, k_size, expand_ratio=4, se_expansion=0.25):
    """Random parameters in PyTorch layouts (inference-mode BN stats)."""
    hidden = int(inp * expand_ratio)
    se_dim = int(inp * se_expansion)
    ks = iter(jax.random.split(key, 24))

    def nrm(shape, scale=0.2):
        return scale * jax.random.normal(next(ks), shape, dtype=jnp.float32)

    def bn(c):
        gamma = 1.0 + nrm((c,), 0.1)
        beta = nrm((c,), 0.1)
        mean = nrm((c,), 0.1)
        var = 1.0 + jnp.abs(nrm((c,), 0.1))
        return (gamma, beta, mean, var)

    return dict(
        bn0=bn(inp),
        w1=nrm((hidden, inp)),             # Conv2d(inp, hidden, 1).weight[:, :, 0, 0]
        bn1=bn(hidden),
        wd=nrm((hidden, k_size, k_size)),  # depthwise Conv2d.weight[:, 0, :, :]
        bn2=bn(hidden),
        se_w1=nrm((se_dim, hidden)),       # Linear(hidden, se_dim).weight
        se_w2=nrm((hidden, se_dim)),       # Linear(se_dim, hidden).weight
        w2=nrm((oup, hidden)),             # Conv2d(hidden, oup, 1).weight[:, :, 0, 0]
        bn3=bn(oup),
    )


def fold_params(raw, eps=1e-5):
    """Fold the (inference-mode) BatchNorms into adjacent weights and pack the
    8 small operands into 2 lane-dense arrays (one hidden-row, one C-row)."""
    def bn_affine(p):
        gamma, beta, mean, var = p
        s = gamma / jnp.sqrt(var + eps)
        return s, beta - mean * s

    s0, b0 = bn_affine(raw["bn0"])
    s1, b1 = bn_affine(raw["bn1"])
    s2, b2 = bn_affine(raw["bn2"])
    s3, b3 = bn_affine(raw["bn3"])

    w1, wd, w2 = raw["w1"], raw["wd"], raw["w2"]
    hidden = w1.shape[0]
    hp = jax.lax.Precision.HIGHEST

    we = (s1[:, None] * w1) * s0[None, :]                              # (hidden, C)
    be = (s1 * jnp.matmul(w1, b0, precision=hp) + b1)[:, None]         # (hidden, 1)
    wdf = s2[:, None] * wd.reshape(hidden, -1)                         # (hidden, K*K)
    b2f = b2[:, None]                                                  # (hidden, 1)
    se1t = raw["se_w1"].T                                              # (hidden, se_dim)
    se2 = raw["se_w2"]                                                 # (hidden, se_dim)
    w2f = s3[:, None] * w2                                             # (C, hidden)
    b3f = b3[:, None]                                                  # (C, 1)

    pack_h = jnp.concatenate([we, be, wdf, b2f, se1t, se2], axis=1)    # (hidden, ...)
    pack_c = jnp.concatenate([w2f, b3f], axis=1)                       # (C, hidden+1)
    return pack_h.astype(jnp.float32), pack_c.astype(jnp.float32)


# ------------------------------ pure-JAX reference ----------------------------

def mbconv_reference(x, raw, eps=1e-5):
    """Unfused NCHW reference mirroring the PyTorch MBConv (inference-mode BN)."""
    def bn(h, p):
        gamma, beta, mean, var = p
        s = gamma / jnp.sqrt(var + eps)
        b = beta - mean * s
        return h * s[None, :, None, None] + b[None, :, None, None]

    B, C, H, W = x.shape
    hp = jax.lax.Precision.HIGHEST
    h = bn(x, raw["bn0"])
    a1 = jnp.einsum("oc,bchw->bohw", raw["w1"], h, precision=hp)
    a1 = jax.nn.gelu(bn(a1, raw["bn1"]), approximate=False)
    K = raw["wd"].shape[-1]
    P = K // 2
    a1p = jnp.pad(a1, ((0, 0), (0, 0), (P, P), (P, P)))
    acc = jnp.zeros_like(a1)
    for i in range(K):
        for j in range(K):
            acc = acc + a1p[:, :, i:i + H, j:j + W] * raw["wd"][:, i, j][None, :, None, None]
    a2 = jax.nn.gelu(bn(acc, raw["bn2"]), approximate=False)
    pooled = jnp.mean(a2, axis=(2, 3))                              # (B, hidden)
    z = jax.nn.gelu(pooled @ raw["se_w1"].T, approximate=False)
    gate = jax.nn.sigmoid(z @ raw["se_w2"].T)
    a3 = a2 * gate[:, :, None, None]
    y = jnp.einsum("oc,bchw->bohw", raw["w2"], a3, precision=hp)
    return x + bn(y, raw["bn3"])


if __name__ == "__main__":
    key = jax.random.PRNGKey(0)
    kx, kp = jax.random.split(key)

    # inp == oup == 8, stride == 1 -> residual branch; hidden = 32, SE dim = 2.
    # B = 4 with B_BLK = 2 -> 2 parallel grid steps (both v7x TCs fed) while
    # still amortizing per-step overhead over 2 images per step.
    B, C, Hsp, Wsp = 4, 8, 16, 16
    x = jax.random.normal(kx, (B, C, Hsp, Wsp), dtype=jnp.float32)
    raw = make_raw_params(kp, inp=C, oup=C, k_size=K_SIZE, expand_ratio=4)
    pack_h, pack_c = fold_params(raw)

    out = mbconv_forward(x, pack_h, pack_c)
    jax.block_until_ready(out)
    assert out.shape == (B, C, Hsp, Wsp)
    assert bool(jnp.all(jnp.isfinite(out)))

    # Correctness check vs. the unfused pure-JAX (exact-GELU, f32) reference.
    # Tolerance covers the review-recommended bf16 MXU operands + tanh GELU.
    ref = mbconv_reference(x, raw)
    max_err = float(jnp.max(jnp.abs(out - ref)))
    assert bool(jnp.allclose(out, ref, rtol=2e-2, atol=3e-2)), max_err

    print("KERNEL_OK")
</pallas_src>

<mosaic_0001>
module attributes {stable_mosaic.version = 11 : i64} {
  func.func @mbconv_kernel(%arg0: i32, %arg1: memref<2x8x256xf32, #tpu.memory_space<vmem>>, %arg2: memref<32x23xf32, #tpu.memory_space<vmem>>, %arg3: memref<8x33xf32, #tpu.memory_space<vmem>>, %arg4: memref<2x8x256xf32, #tpu.memory_space<vmem>>) attributes {dimension_semantics = [#tpu.dimension_semantics<parallel>], iteration_bounds = array<i64: 2>, scalar_prefetch = 0 : i64, scratch_operands = 0 : i64, tpu.core_type = #tpu.core_type<tc>, window_params = [{transform_indices = @transform_0, window_bounds = array<i64: 2, 8, 256>}, {pipeline_mode = #tpu.pipeline_mode<synchronous>, transform_indices = @transform_1, window_bounds = array<i64: 32, 23>}, {pipeline_mode = #tpu.pipeline_mode<synchronous>, transform_indices = @transform_2, window_bounds = array<i64: 8, 33>}, {transform_indices = @transform_3, window_bounds = array<i64: 2, 8, 256>}]} {
    %c0 = arith.constant 0 : index
    %c0_0 = arith.constant 0 : index
    %0 = vector.load %arg2[%c0, %c0_0] : memref<32x23xf32, #tpu.memory_space<vmem>>, vector<32x23xf32>
    %1 = vector.extract_strided_slice %0 {offsets = [0, 0], sizes = [32, 8], strides = [1, 1]} : vector<32x23xf32> to vector<32x8xf32>
    %2 = vector.extract_strided_slice %0 {offsets = [0, 8], sizes = [32, 1], strides = [1, 1]} : vector<32x23xf32> to vector<32x1xf32>
    %3 = vector.extract_strided_slice %0 {offsets = [0, 9], sizes = [32, 9], strides = [1, 1]} : vector<32x23xf32> to vector<32x9xf32>
    %4 = vector.extract_strided_slice %0 {offsets = [0, 18], sizes = [32, 1], strides = [1, 1]} : vector<32x23xf32> to vector<32x1xf32>
    %5 = vector.extract_strided_slice %0 {offsets = [0, 19], sizes = [32, 2], strides = [1, 1]} : vector<32x23xf32> to vector<32x2xf32>
    %6 = vector.extract_strided_slice %0 {offsets = [0, 21], sizes = [32, 2], strides = [1, 1]} : vector<32x23xf32> to vector<32x2xf32>
    %c0_1 = arith.constant 0 : index
    %c0_2 = arith.constant 0 : index
    %7 = vector.load %arg3[%c0_1, %c0_2] : memref<8x33xf32, #tpu.memory_space<vmem>>, vector<8x33xf32>
    %8 = vector.extract_strided_slice %7 {offsets = [0, 0], sizes = [8, 32], strides = [1, 1]} : vector<8x33xf32> to vector<8x32xf32>
    %9 = vector.extract_strided_slice %7 {offsets = [0, 32], sizes = [8, 1], strides = [1, 1]} : vector<8x33xf32> to vector<8x1xf32>
    %10 = arith.truncf %1 : vector<32x8xf32> to vector<32x8xbf16>
    %11 = arith.truncf %8 : vector<8x32xf32> to vector<8x32xbf16>
    %12 = tpu.iota {dimensions = array<i32: 1>} : vector<1x290xi32>
    %c15_i32 = arith.constant 15 : i32
    %13 = vector.broadcast %c15_i32 : i32 to vector<1x290xi32>
    %14 = arith.addi %12, %13 : vector<1x290xi32>
    %c16_i32 = arith.constant 16 : i32
    %c0_i32 = arith.constant 0 : i32
    %15 = arith.cmpi eq, %c16_i32, %c0_i32 : i32
    %c1_i32 = arith.constant 1 : i32
    %16 = arith.select %15, %c1_i32, %c16_i32 : i32
    %17 = vector.broadcast %16 : i32 to vector<1x290xi32>
    %18 = arith.remsi %14, %17 : vector<1x290xi32>
    %c0_i32_3 = arith.constant 0 : i32
    %19 = vector.broadcast %c0_i32_3 : i32 to vector<1x290xi32>
    %20 = arith.cmpi ne, %18, %19 : vector<1x290xi32>
    %c0_i32_4 = arith.constant 0 : i32
    %21 = vector.broadcast %c0_i32_4 : i32 to vector<1x290xi32>
    %22 = arith.cmpi slt, %18, %21 : vector<1x290xi32>
    %c0_i32_5 = arith.constant 0 : i32
    %23 = arith.cmpi slt, %16, %c0_i32_5 : i32
    %24 = vector.broadcast %23 : i1 to vector<1x290xi1>
    %25 = vector.broadcast %24 : vector<1x290xi1> to vector<1x290xi1>
    %26 = arith.xori %22, %25 : vector<1x290xi1>
    %27 = arith.andi %26, %20 : vector<1x290xi1>
    %28 = vector.broadcast %16 : i32 to vector<1x290xi32>
    %29 = arith.addi %18, %28 : vector<1x290xi32>
    %30 = arith.select %27, %29, %18 : vector<1x290xi1>, vector<1x290xi32>
    %cst = arith.constant 0.000000e+00 : f32
    %31 = vector.broadcast %cst : f32 to vector<32x17xf32>
    %c0_6 = arith.constant 0 : index
    %c0_7 = arith.constant 0 : index
    %c0_8 = arith.constant 0 : index
    %32 = vector.load %arg1[%c0_6, %c0_7, %c0_8] : memref<2x8x256xf32, #tpu.memory_space<vmem>>, vector<1x8x256xf32>
    %33 = vector.shape_cast %32 : vector<1x8x256xf32> to vector<8x256xf32>
    %34 = arith.truncf %33 : vector<8x256xf32> to vector<8x256xbf16>
    %cst_9 = arith.constant dense<0.000000e+00> : vector<32x256xf32>
    %35 = tpu.matmul %10, %34, %cst_9 {dimension_numbers = #tpu.dot_dimension_numbers<[1], [0], [0], [1], [0, 0, 1, 1], [], []>} : vector<32x8xbf16>, vector<8x256xbf16>, vector<32x256xf32> -> vector<32x256xf32>
    %36 = vector.broadcast %2 : vector<32x1xf32> to vector<32x256xf32>
    %37 = arith.addf %35, %36 : vector<32x256xf32>
    %38 = arith.mulf %37, %37 : vector<32x256xf32>
    %39 = arith.mulf %37, %38 : vector<32x256xf32>
    %cst_10 = arith.constant 4.471500e-02 : f32
    %40 = vector.broadcast %cst_10 : f32 to vector<32x256xf32>
    %41 = arith.mulf %40, %39 : vector<32x256xf32>
    %42 = arith.addf %37, %41 : vector<32x256xf32>
    %cst_11 = arith.constant 0.797884583 : f32
    %43 = vector.broadcast %cst_11 : f32 to vector<32x256xf32>
    %44 = arith.mulf %43, %42 : vector<32x256xf32>
    %45 = math.tanh %44 : vector<32x256xf32>
    %cst_12 = arith.constant 1.000000e+00 : f32
    %46 = vector.broadcast %cst_12 : f32 to vector<32x256xf32>
    %47 = arith.addf %46, %45 : vector<32x256xf32>
    %cst_13 = arith.constant 5.000000e-01 : f32
    %48 = vector.broadcast %cst_13 : f32 to vector<32x256xf32>
    %49 = arith.mulf %48, %47 : vector<32x256xf32>
    %50 = arith.mulf %37, %49 : vector<32x256xf32>
    %51 = tpu.concatenate %31, %50, %31 in 1 : vector<32x17xf32>, vector<32x256xf32>, vector<32x17xf32> -> vector<32x290xf32>
    %c15_i32_14 = arith.constant 15 : i32
    %52 = vector.broadcast %c15_i32_14 : i32 to vector<1x290xi32>
    %53 = arith.cmpi slt, %30, %52 : vector<1x290xi32>
    %cst_15 = arith.constant 0.000000e+00 : f32
    %54 = vector.shape_cast %53 : vector<1x290xi1> to vector<1x290xi1>
    %55 = vector.broadcast %54 : vector<1x290xi1> to vector<32x290xi1>
    %56 = vector.broadcast %cst_15 : f32 to vector<32x290xf32>
    %57 = arith.select %55, %51, %56 : vector<32x290xi1>, vector<32x290xf32>
    %c1_i32_16 = arith.constant 1 : i32
    %58 = vector.broadcast %c1_i32_16 : i32 to vector<1x290xi32>
    %59 = arith.cmpi sge, %30, %58 : vector<1x290xi32>
    %cst_17 = arith.constant 0.000000e+00 : f32
    %60 = vector.shape_cast %59 : vector<1x290xi1> to vector<1x290xi1>
    %61 = vector.broadcast %60 : vector<1x290xi1> to vector<32x290xi1>
    %62 = vector.broadcast %cst_17 : f32 to vector<32x290xf32>
    %63 = arith.select %61, %51, %62 : vector<32x290xi1>, vector<32x290xf32>
    %cst_18 = arith.constant 0.000000e+00 : f32
    %64 = vector.broadcast %cst_18 : f32 to vector<32x256xf32>
    %65 = vector.extract_strided_slice %57 {offsets = [0, 0], sizes = [32, 256], strides = [1, 1]} : vector<32x290xf32> to vector<32x256xf32>
    %66 = vector.extract_strided_slice %3 {offsets = [0, 0], sizes = [32, 1], strides = [1, 1]} : vector<32x9xf32> to vector<32x1xf32>
    %67 = vector.broadcast %66 : vector<32x1xf32> to vector<32x256xf32>
    %68 = arith.mulf %65, %67 : vector<32x256xf32>
    %69 = arith.addf %64, %68 : vector<32x256xf32>
    %70 = vector.extract_strided_slice %51 {offsets = [0, 1], sizes = [32, 256], strides = [1, 1]} : vector<32x290xf32> to vector<32x256xf32>
    %71 = vector.extract_strided_slice %3 {offsets = [0, 1], sizes = [32, 1], strides = [1, 1]} : vector<32x9xf32> to vector<32x1xf32>
    %72 = vector.broadcast %71 : vector<32x1xf32> to vector<32x256xf32>
    %73 = arith.mulf %70, %72 : vector<32x256xf32>
    %74 = arith.addf %69, %73 : vector<32x256xf32>
    %75 = vector.extract_strided_slice %63 {offsets = [0, 2], sizes = [32, 256], strides = [1, 1]} : vector<32x290xf32> to vector<32x256xf32>
    %76 = vector.extract_strided_slice %3 {offsets = [0, 2], sizes = [32, 1], strides = [1, 1]} : vector<32x9xf32> to vector<32x1xf32>
    %77 = vector.broadcast %76 : vector<32x1xf32> to vector<32x256xf32>
    %78 = arith.mulf %75, %77 : vector<32x256xf32>
    %79 = arith.addf %74, %78 : vector<32x256xf32>
    %80 = vector.extract_strided_slice %57 {offsets = [0, 16], sizes = [32, 256], strides = [1, 1]} : vector<32x290xf32> to vector<32x256xf32>
    %81 = vector.extract_strided_slice %3 {offsets = [0, 3], sizes = [32, 1], strides = [1, 1]} : vector<32x9xf32> to vector<32x1xf32>
    %82 = vector.broadcast %81 : vector<32x1xf32> to vector<32x256xf32>
    %83 = arith.mulf %80, %82 : vector<32x256xf32>
    %84 = arith.addf %79, %83 : vector<32x256xf32>
    %85 = vector.extract_strided_slice %51 {offsets = [0, 17], sizes = [32, 256], strides = [1, 1]} : vector<32x290xf32> to vector<32x256xf32>
    %86 = vector.extract_strided_slice %3 {offsets = [0, 4], sizes = [32, 1], strides = [1, 1]} : vector<32x9xf32> to vector<32x1xf32>
    %87 = vector.broadcast %86 : vector<32x1xf32> to vector<32x256xf32>
    %88 = arith.mulf %85, %87 : vector<32x256xf32>
    %89 = arith.addf %84, %88 : vector<32x256xf32>
    %90 = vector.extract_strided_slice %63 {offsets = [0, 18], sizes = [32, 256], strides = [1, 1]} : vector<32x290xf32> to vector<32x256xf32>
    %91 = vector.extract_strided_slice %3 {offsets = [0, 5], sizes = [32, 1], strides = [1, 1]} : vector<32x9xf32> to vector<32x1xf32>
    %92 = vector.broadcast %91 : vector<32x1xf32> to vector<32x256xf32>
    %93 = arith.mulf %90, %92 : vector<32x256xf32>
    %94 = arith.addf %89, %93 : vector<32x256xf32>
    %95 = vector.extract_strided_slice %57 {offsets = [0, 32], sizes = [32, 256], strides = [1, 1]} : vector<32x290xf32> to vector<32x256xf32>
    %96 = vector.extract_strided_slice %3 {offsets = [0, 6], sizes = [32, 1], strides = [1, 1]} : vector<32x9xf32> to vector<32x1xf32>
    %97 = vector.broadcast %96 : vector<32x1xf32> to vector<32x256xf32>
    %98 = arith.mulf %95, %97 : vector<32x256xf32>
    %99 = arith.addf %94, %98 : vector<32x256xf32>
    %100 = vector.extract_strided_slice %51 {offsets = [0, 33], sizes = [32, 256], strides = [1, 1]} : vector<32x290xf32> to vector<32x256xf32>
    %101 = vector.extract_strided_slice %3 {offsets = [0, 7], sizes = [32, 1], strides = [1, 1]} : vector<32x9xf32> to vector<32x1xf32>
    %102 = vector.broadcast %101 : vector<32x1xf32> to vector<32x256xf32>
    %103 = arith.mulf %100, %102 : vector<32x256xf32>
    %104 = arith.addf %99, %103 : vector<32x256xf32>
    %105 = vector.extract_strided_slice %63 {offsets = [0, 34], sizes = [32, 256], strides = [1, 1]} : vector<32x290xf32> to vector<32x256xf32>
    %106 = vector.extract_strided_slice %3 {offsets = [0, 8], sizes = [32, 1], strides = [1, 1]} : vector<32x9xf32> to vector<32x1xf32>
    %107 = vector.broadcast %106 : vector<32x1xf32> to vector<32x256xf32>
    %108 = arith.mulf %105, %107 : vector<32x256xf32>
    %109 = arith.addf %104, %108 : vector<32x256xf32>
    %110 = vector.broadcast %4 : vector<32x1xf32> to vector<32x256xf32>
    %111 = arith.addf %109, %110 : vector<32x256xf32>
    %112 = arith.mulf %111, %111 : vector<32x256xf32>
    %113 = arith.mulf %111, %112 : vector<32x256xf32>
    %cst_19 = arith.constant 4.471500e-02 : f32
    %114 = vector.broadcast %cst_19 : f32 to vector<32x256xf32>
    %115 = arith.mulf %114, %113 : vector<32x256xf32>
    %116 = arith.addf %111, %115 : vector<32x256xf32>
    %cst_20 = arith.constant 0.797884583 : f32
    %117 = vector.broadcast %cst_20 : f32 to vector<32x256xf32>
    %118 = arith.mulf %117, %116 : vector<32x256xf32>
    %119 = math.tanh %118 : vector<32x256xf32>
    %cst_21 = arith.constant 1.000000e+00 : f32
    %120 = vector.broadcast %cst_21 : f32 to vector<32x256xf32>
    %121 = arith.addf %120, %119 : vector<32x256xf32>
    %cst_22 = arith.constant 5.000000e-01 : f32
    %122 = vector.broadcast %cst_22 : f32 to vector<32x256xf32>
    %123 = arith.mulf %122, %121 : vector<32x256xf32>
    %124 = arith.mulf %111, %123 : vector<32x256xf32>
    %cst_23 = arith.constant dense<0.000000e+00> : vector<32xf32>
    %125 = vector.multi_reduction <add>, %124, %cst_23 [1] : vector<32x256xf32> to vector<32xf32>
    %126 = vector.shape_cast %125 : vector<32xf32> to vector<32x1xf32>
    %cst_24 = arith.constant 2.560000e+02 : f32
    %127 = vector.broadcast %cst_24 : f32 to vector<32x1xf32>
    %128 = arith.divf %126, %127 : vector<32x1xf32>
    %129 = vector.broadcast %128 : vector<32x1xf32> to vector<32x2xf32>
    %130 = arith.mulf %5, %129 : vector<32x2xf32>
    %cst_25 = arith.constant dense<0.000000e+00> : vector<2xf32>
    %131 = vector.multi_reduction <add>, %130, %cst_25 [0] : vector<32x2xf32> to vector<2xf32>
    %132 = vector.shape_cast %131 : vector<2xf32> to vector<1x2xf32>
    %133 = arith.mulf %132, %132 : vector<1x2xf32>
    %134 = arith.mulf %132, %133 : vector<1x2xf32>
    %cst_26 = arith.constant 4.471500e-02 : f32
    %135 = vector.broadcast %cst_26 : f32 to vector<1x2xf32>
    %136 = arith.mulf %135, %134 : vector<1x2xf32>
    %137 = arith.addf %132, %136 : vector<1x2xf32>
    %cst_27 = arith.constant 0.797884583 : f32
    %138 = vector.broadcast %cst_27 : f32 to vector<1x2xf32>
    %139 = arith.mulf %138, %137 : vector<1x2xf32>
    %140 = math.tanh %139 : vector<1x2xf32>
    %cst_28 = arith.constant 1.000000e+00 : f32
    %141 = vector.broadcast %cst_28 : f32 to vector<1x2xf32>
    %142 = arith.addf %141, %140 : vector<1x2xf32>
    %cst_29 = arith.constant 5.000000e-01 : f32
    %143 = vector.broadcast %cst_29 : f32 to vector<1x2xf32>
    %144 = arith.mulf %143, %142 : vector<1x2xf32>
    %145 = arith.mulf %132, %144 : vector<1x2xf32>
    %146 = vector.broadcast %145 : vector<1x2xf32> to vector<32x2xf32>
    %147 = arith.mulf %6, %146 : vector<32x2xf32>
    %cst_30 = arith.constant dense<0.000000e+00> : vector<32xf32>
    %148 = vector.multi_reduction <add>, %147, %cst_30 [1] : vector<32x2xf32> to vector<32xf32>
    %149 = vector.shape_cast %148 : vector<32xf32> to vector<32x1xf32>
    %150 = arith.negf %149 : vector<32x1xf32>
    %151 = math.exp %150 : vector<32x1xf32>
    %cst_31 = arith.constant 1.000000e+00 : f32
    %152 = vector.broadcast %cst_31 : f32 to vector<32x1xf32>
    %153 = arith.addf %152, %151 : vector<32x1xf32>
    %154 = arith.divf %152, %153 : vector<32x1xf32>
    %155 = vector.broadcast %154 : vector<32x1xf32> to vector<32x256xf32>
    %156 = arith.mulf %124, %155 : vector<32x256xf32>
    %157 = arith.truncf %156 : vector<32x256xf32> to vector<32x256xbf16>
    %cst_32 = arith.constant dense<0.000000e+00> : vector<8x256xf32>
    %158 = tpu.matmul %11, %157, %cst_32 {dimension_numbers = #tpu.dot_dimension_numbers<[1], [0], [0], [1], [0, 0, 1, 1], [], []>} : vector<8x32xbf16>, vector<32x256xbf16>, vector<8x256xf32> -> vector<8x256xf32>
    %159 = vector.broadcast %9 : vector<8x1xf32> to vector<8x256xf32>
    %160 = arith.addf %158, %159 : vector<8x256xf32>
    %161 = arith.addf %33, %160 : vector<8x256xf32>
    %c0_33 = arith.constant 0 : index
    %c0_34 = arith.constant 0 : index
    %c0_35 = arith.constant 0 : index
    %162 = vector.load %arg4[%c0_33, %c0_34, %c0_35] : memref<2x8x256xf32, #tpu.memory_space<vmem>>, vector<1x8x256xf32>
    %163 = vector.shape_cast %162 : vector<1x8x256xf32> to vector<8x256xf32>
    %164 = vector.shape_cast %161 : vector<8x256xf32> to vector<1x8x256xf32>
    tpu.vector_store %arg4[%c0_33, %c0_34, %c0_35], %164 {strides = array<i32>} : memref<2x8x256xf32, #tpu.memory_space<vmem>>, vector<1x8x256xf32>,
    %c1 = arith.constant 1 : index
    %c0_36 = arith.constant 0 : index
    %c0_37 = arith.constant 0 : index
    %165 = vector.load %arg1[%c1, %c0_36, %c0_37] : memref<2x8x256xf32, #tpu.memory_space<vmem>>, vector<1x8x256xf32>
    %166 = vector.shape_cast %165 : vector<1x8x256xf32> to vector<8x256xf32>
    %167 = arith.truncf %166 : vector<8x256xf32> to vector<8x256xbf16>
    %cst_38 = arith.constant dense<0.000000e+00> : vector<32x256xf32>
    %168 = tpu.matmul %10, %167, %cst_38 {dimension_numbers = #tpu.dot_dimension_numbers<[1], [0], [0], [1], [0, 0, 1, 1], [], []>} : vector<32x8xbf16>, vector<8x256xbf16>, vector<32x256xf32> -> vector<32x256xf32>
    %169 = vector.broadcast %2 : vector<32x1xf32> to vector<32x256xf32>
    %170 = arith.addf %168, %169 : vector<32x256xf32>
    %171 = arith.mulf %170, %170 : vector<32x256xf32>
    %172 = arith.mulf %170, %171 : vector<32x256xf32>
    %cst_39 = arith.constant 4.471500e-02 : f32
    %173 = vector.broadcast %cst_39 : f32 to vector<32x256xf32>
    %174 = arith.mulf %173, %172 : vector<32x256xf32>
    %175 = arith.addf %170, %174 : vector<32x256xf32>
    %cst_40 = arith.constant 0.797884583 : f32
    %176 = vector.broadcast %cst_40 : f32 to vector<32x256xf32>
    %177 = arith.mulf %176, %175 : vector<32x256xf32>
    %178 = math.tanh %177 : vector<32x256xf32>
    %cst_41 = arith.constant 1.000000e+00 : f32
    %179 = vector.broadcast %cst_41 : f32 to vector<32x256xf32>
    %180 = arith.addf %179, %178 : vector<32x256xf32>
    %cst_42 = arith.constant 5.000000e-01 : f32
    %181 = vector.broadcast %cst_42 : f32 to vector<32x256xf32>
    %182 = arith.mulf %181, %180 : vector<32x256xf32>
    %183 = arith.mulf %170, %182 : vector<32x256xf32>
    %184 = tpu.concatenate %31, %183, %31 in 1 : vector<32x17xf32>, vector<32x256xf32>, vector<32x17xf32> -> vector<32x290xf32>
    %c15_i32_43 = arith.constant 15 : i32
    %185 = vector.broadcast %c15_i32_43 : i32 to vector<1x290xi32>
    %186 = arith.cmpi slt, %30, %185 : vector<1x290xi32>
    %cst_44 = arith.constant 0.000000e+00 : f32
    %187 = vector.shape_cast %186 : vector<1x290xi1> to vector<1x290xi1>
    %188 = vector.broadcast %187 : vector<1x290xi1> to vector<32x290xi1>
    %189 = vector.broadcast %cst_44 : f32 to vector<32x290xf32>
    %190 = arith.select %188, %184, %189 : vector<32x290xi1>, vector<32x290xf32>
    %c1_i32_45 = arith.constant 1 : i32
    %191 = vector.broadcast %c1_i32_45 : i32 to vector<1x290xi32>
    %192 = arith.cmpi sge, %30, %191 : vector<1x290xi32>
    %cst_46 = arith.constant 0.000000e+00 : f32
    %193 = vector.shape_cast %192 : vector<1x290xi1> to vector<1x290xi1>
    %194 = vector.broadcast %193 : vector<1x290xi1> to vector<32x290xi1>
    %195 = vector.broadcast %cst_46 : f32 to vector<32x290xf32>
    %196 = arith.select %194, %184, %195 : vector<32x290xi1>, vector<32x290xf32>
    %cst_47 = arith.constant 0.000000e+00 : f32
    %197 = vector.broadcast %cst_47 : f32 to vector<32x256xf32>
    %198 = vector.extract_strided_slice %190 {offsets = [0, 0], sizes = [32, 256], strides = [1, 1]} : vector<32x290xf32> to vector<32x256xf32>
    %199 = vector.extract_strided_slice %3 {offsets = [0, 0], sizes = [32, 1], strides = [1, 1]} : vector<32x9xf32> to vector<32x1xf32>
    %200 = vector.broadcast %199 : vector<32x1xf32> to vector<32x256xf32>
    %201 = arith.mulf %198, %200 : vector<32x256xf32>
    %202 = arith.addf %197, %201 : vector<32x256xf32>
    %203 = vector.extract_strided_slice %184 {offsets = [0, 1], sizes = [32, 256], strides = [1, 1]} : vector<32x290xf32> to vector<32x256xf32>
    %204 = vector.extract_strided_slice %3 {offsets = [0, 1], sizes = [32, 1], strides = [1, 1]} : vector<32x9xf32> to vector<32x1xf32>
    %205 = vector.broadcast %204 : vector<32x1xf32> to vector<32x256xf32>
    %206 = arith.mulf %203, %205 : vector<32x256xf32>
    %207 = arith.addf %202, %206 : vector<32x256xf32>
    %208 = vector.extract_strided_slice %196 {offsets = [0, 2], sizes = [32, 256], strides = [1, 1]} : vector<32x290xf32> to vector<32x256xf32>
    %209 = vector.extract_strided_slice %3 {offsets = [0, 2], sizes = [32, 1], strides = [1, 1]} : vector<32x9xf32> to vector<32x1xf32>
    %210 = vector.broadcast %209 : vector<32x1xf32> to vector<32x256xf32>
    %211 = arith.mulf %208, %210 : vector<32x256xf32>
    %212 = arith.addf %207, %211 : vector<32x256xf32>
    %213 = vector.extract_strided_slice %190 {offsets = [0, 16], sizes = [32, 256], strides = [1, 1]} : vector<32x290xf32> to vector<32x256xf32>
    %214 = vector.extract_strided_slice %3 {offsets = [0, 3], sizes = [32, 1], strides = [1, 1]} : vector<32x9xf32> to vector<32x1xf32>
    %215 = vector.broadcast %214 : vector<32x1xf32> to vector<32x256xf32>
    %216 = arith.mulf %213, %215 : vector<32x256xf32>
    %217 = arith.addf %212, %216 : vector<32x256xf32>
    %218 = vector.extract_strided_slice %184 {offsets = [0, 17], sizes = [32, 256], strides = [1, 1]} : vector<32x290xf32> to vector<32x256xf32>
    %219 = vector.extract_strided_slice %3 {offsets = [0, 4], sizes = [32, 1], strides = [1, 1]} : vector<32x9xf32> to vector<32x1xf32>
    %220 = vector.broadcast %219 : vector<32x1xf32> to vector<32x256xf32>
    %221 = arith.mulf %218, %220 : vector<32x256xf32>
    %222 = arith.addf %217, %221 : vector<32x256xf32>
    %223 = vector.extract_strided_slice %196 {offsets = [0, 18], sizes = [32, 256], strides = [1, 1]} : vector<32x290xf32> to vector<32x256xf32>
    %224 = vector.extract_strided_slice %3 {offsets = [0, 5], sizes = [32, 1], strides = [1, 1]} : vector<32x9xf32> to vector<32x1xf32>
    %225 = vector.broadcast %224 : vector<32x1xf32> to vector<32x256xf32>
    %226 = arith.mulf %223, %225 : vector<32x256xf32>
    %227 = arith.addf %222, %226 : vector<32x256xf32>
    %228 = vector.extract_strided_slice %190 {offsets = [0, 32], sizes = [32, 256], strides = [1, 1]} : vector<32x290xf32> to vector<32x256xf32>
    %229 = vector.extract_strided_slice %3 {offsets = [0, 6], sizes = [32, 1], strides = [1, 1]} : vector<32x9xf32> to vector<32x1xf32>
    %230 = vector.broadcast %229 : vector<32x1xf32> to vector<32x256xf32>
    %231 = arith.mulf %228, %230 : vector<32x256xf32>
    %232 = arith.addf %227, %231 : vector<32x256xf32>
    %233 = vector.extract_strided_slice %184 {offsets = [0, 33], sizes = [32, 256], strides = [1, 1]} : vector<32x290xf32> to vector<32x256xf32>
    %234 = vector.extract_strided_slice %3 {offsets = [0, 7], sizes = [32, 1], strides = [1, 1]} : vector<32x9xf32> to vector<32x1xf32>
    %235 = vector.broadcast %234 : vector<32x1xf32> to vector<32x256xf32>
    %236 = arith.mulf %233, %235 : vector<32x256xf32>
    %237 = arith.addf %232, %236 : vector<32x256xf32>
    %238 = vector.extract_strided_slice %196 {offsets = [0, 34], sizes = [32, 256], strides = [1, 1]} : vector<32x290xf32> to vector<32x256xf32>
    %239 = vector.extract_strided_slice %3 {offsets = [0, 8], sizes = [32, 1], strides = [1, 1]} : vector<32x9xf32> to vector<32x1xf32>
    %240 = vector.broadcast %239 : vector<32x1xf32> to vector<32x256xf32>
    %241 = arith.mulf %238, %240 : vector<32x256xf32>
    %242 = arith.addf %237, %241 : vector<32x256xf32>
    %243 = vector.broadcast %4 : vector<32x1xf32> to vector<32x256xf32>
    %244 = arith.addf %242, %243 : vector<32x256xf32>
    %245 = arith.mulf %244, %244 : vector<32x256xf32>
    %246 = arith.mulf %244, %245 : vector<32x256xf32>
    %cst_48 = arith.constant 4.471500e-02 : f32
    %247 = vector.broadcast %cst_48 : f32 to vector<32x256xf32>
    %248 = arith.mulf %247, %246 : vector<32x256xf32>
    %249 = arith.addf %244, %248 : vector<32x256xf32>
    %cst_49 = arith.constant 0.797884583 : f32
    %250 = vector.broadcast %cst_49 : f32 to vector<32x256xf32>
    %251 = arith.mulf %250, %249 : vector<32x256xf32>
    %252 = math.tanh %251 : vector<32x256xf32>
    %cst_50 = arith.constant 1.000000e+00 : f32
    %253 = vector.broadcast %cst_50 : f32 to vector<32x256xf32>
    %254 = arith.addf %253, %252 : vector<32x256xf32>
    %cst_51 = arith.constant 5.000000e-01 : f32
    %255 = vector.broadcast %cst_51 : f32 to vector<32x256xf32>
    %256 = arith.mulf %255, %254 : vector<32x256xf32>
    %257 = arith.mulf %244, %256 : vector<32x256xf32>
    %cst_52 = arith.constant dense<0.000000e+00> : vector<32xf32>
    %258 = vector.multi_reduction <add>, %257, %cst_52 [1] : vector<32x256xf32> to vector<32xf32>
    %259 = vector.shape_cast %258 : vector<32xf32> to vector<32x1xf32>
    %cst_53 = arith.constant 2.560000e+02 : f32
    %260 = vector.broadcast %cst_53 : f32 to vector<32x1xf32>
    %261 = arith.divf %259, %260 : vector<32x1xf32>
    %262 = vector.broadcast %261 : vector<32x1xf32> to vector<32x2xf32>
    %263 = arith.mulf %5, %262 : vector<32x2xf32>
    %cst_54 = arith.constant dense<0.000000e+00> : vector<2xf32>
    %264 = vector.multi_reduction <add>, %263, %cst_54 [0] : vector<32x2xf32> to vector<2xf32>
    %265 = vector.shape_cast %264 : vector<2xf32> to vector<1x2xf32>
    %266 = arith.mulf %265, %265 : vector<1x2xf32>
    %267 = arith.mulf %265, %266 : vector<1x2xf32>
    %cst_55 = arith.constant 4.471500e-02 : f32
    %268 = vector.broadcast %cst_55 : f32 to vector<1x2xf32>
    %269 = arith.mulf %268, %267 : vector<1x2xf32>
    %270 = arith.addf %265, %269 : vector<1x2xf32>
    %cst_56 = arith.constant 0.797884583 : f32
    %271 = vector.broadcast %cst_56 : f32 to vector<1x2xf32>
    %272 = arith.mulf %271, %270 : vector<1x2xf32>
    %273 = math.tanh %272 : vector<1x2xf32>
    %cst_57 = arith.constant 1.000000e+00 : f32
    %274 = vector.broadcast %cst_57 : f32 to vector<1x2xf32>
    %275 = arith.addf %274, %273 : vector<1x2xf32>
    %cst_58 = arith.constant 5.000000e-01 : f32
    %276 = vector.broadcast %cst_58 : f32 to vector<1x2xf32>
    %277 = arith.mulf %276, %275 : vector<1x2xf32>
    %278 = arith.mulf %265, %277 : vector<1x2xf32>
    %279 = vector.broadcast %278 : vector<1x2xf32> to vector<32x2xf32>
    %280 = arith.mulf %6, %279 : vector<32x2xf32>
    %cst_59 = arith.constant dense<0.000000e+00> : vector<32xf32>
    %281 = vector.multi_reduction <add>, %280, %cst_59 [1] : vector<32x2xf32> to vector<32xf32>
    %282 = vector.shape_cast %281 : vector<32xf32> to vector<32x1xf32>
    %283 = arith.negf %282 : vector<32x1xf32>
    %284 = math.exp %283 : vector<32x1xf32>
    %cst_60 = arith.constant 1.000000e+00 : f32
    %285 = vector.broadcast %cst_60 : f32 to vector<32x1xf32>
    %286 = arith.addf %285, %284 : vector<32x1xf32>
    %287 = arith.divf %285, %286 : vector<32x1xf32>
    %288 = vector.broadcast %287 : vector<32x1xf32> to vector<32x256xf32>
    %289 = arith.mulf %257, %288 : vector<32x256xf32>
    %290 = arith.truncf %289 : vector<32x256xf32> to vector<32x256xbf16>
    %cst_61 = arith.constant dense<0.000000e+00> : vector<8x256xf32>
    %291 = tpu.matmul %11, %290, %cst_61 {dimension_numbers = #tpu.dot_dimension_numbers<[1], [0], [0], [1], [0, 0, 1, 1], [], []>} : vector<8x32xbf16>, vector<32x256xbf16>, vector<8x256xf32> -> vector<8x256xf32>
    %292 = vector.broadcast %9 : vector<8x1xf32> to vector<8x256xf32>
    %293 = arith.addf %291, %292 : vector<8x256xf32>
    %294 = arith.addf %166, %293 : vector<8x256xf32>
    %c1_62 = arith.constant 1 : index
    %c0_63 = arith.constant 0 : index
    %c0_64 = arith.constant 0 : index
    %295 = vector.load %arg4[%c1_62, %c0_63, %c0_64] : memref<2x8x256xf32, #tpu.memory_space<vmem>>, vector<1x8x256xf32>
    %296 = vector.shape_cast %295 : vector<1x8x256xf32> to vector<8x256xf32>
    %297 = vector.shape_cast %294 : vector<8x256xf32> to vector<1x8x256xf32>
    tpu.vector_store %arg4[%c1_62, %c0_63, %c0_64], %297 {strides = array<i32>} : memref<2x8x256xf32, #tpu.memory_space<vmem>>, vector<1x8x256xf32>,
    return
  }
  func.func @transform_0(%arg0: i32) -> (i32, i32, i32) {
    %c0_i32 = arith.constant 0 : i32
    %c0_i32_0 = arith.constant 0 : i32
    %c0_i32_1 = arith.constant 0 : i32
    return %arg0, %c0_i32, %c0_i32_0 : i32, i32, i32
  }
  func.func @transform_1(%arg0: i32) -> (i32, i32) {
    %c0_i32 = arith.constant 0 : i32
    %c0_i32_0 = arith.constant 0 : i32
    %c0_i32_1 = arith.constant 0 : i32
    return %c0_i32, %c0_i32_0 : i32, i32
  }
  func.func @transform_2(%arg0: i32) -> (i32, i32) {
    %c0_i32 = arith.constant 0 : i32
    %c0_i32_0 = arith.constant 0 : i32
    %c0_i32_1 = arith.constant 0 : i32
    return %c0_i32, %c0_i32_0 : i32, i32
  }
  func.func @transform_3(%arg0: i32) -> (i32, i32, i32) {
    %c0_i32 = arith.constant 0 : i32
    %c0_i32_0 = arith.constant 0 : i32
    %c0_i32_1 = arith.constant 0 : i32
    return %arg0, %c0_i32, %c0_i32_0 : i32, i32, i32
  }
}

</mosaic_0001>

<llo_original>
// kernel: mbconv_forward.1
$region0: #{mbconv_forward.1}
  #allocation0 [shape = 'u32[]', space=smem, size = 0x4, offset = 0x4, fixed_abs, tag = 'smem constant byte address 0x4 - core index']
  #allocation1 [shape = 'u32[72,128]{1,0:T(1,128)}', space=vmem, size = 0x9000, scoped, tag = 'internal scratch']
  %s0 = inlined_call_operand.vmem [shape: f32[4,8,256], index: 0, kind: input, shape index: {}, may-alias: {0,3}]
  %s1 = inlined_call_operand.vmem [shape: f32[32,23], index: 1, kind: input, shape index: {}]
  %s2 = inlined_call_operand.vmem [shape: f32[8,33], index: 2, kind: input, shape index: {}]
  %s3 = inlined_call_operand.vmem [shape: f32[4,8,256], index: 3, kind: output, shape index: {}, may-alias: {0,3}]
  %s4 = sld [smem:[#allocation0]]
  $region45: #{mbconv_forward.1} parent=0
    _
  %s6 = ssub.s32 1, %s4
  %s7 = scalar_select 0, %s6, %s4
  loop: start=0, step=1, limit=4
  $region2: #{mbconv_forward.1} parent=0 // loop_pre_header
    _
  $region3: #{mbconv_forward.1} parent=0 // loop_header
    %s9 = sphi 0, %s13
    %p10 = scmp.ge.s32.totalorder %s9, 4
    %s19 = sphi 0, %s21
    %s22 = sphi 0, %s19
    %s23 = sphi 0, %s22
    %s39 = sphi 0, %s23
    %s43 = sphi 0, %s43
    %s45 = sphi 0, %s43
    %s46 = sphi 0, %s45
    %s60 = sphi 0, %s46
    %s64 = sphi 0, %s64
    %s66 = sphi 0, %s64
    %s67 = sphi 0, %s66
    %s81 = sphi 0, %s67
    %s87 = sphi 0, %s89
    %s90 = sphi 0, %s87
    %s91 = sphi 0, %s90
    %s107 = sphi 0, %s91
  $region4: #{mbconv_forward.1} parent=0 // loop_header_branch
    %12 = sbr.rel (%p10) target = $region8
  $region5: #{mbconv_forward.1} parent=0 // loop_body
    %s14 = ssub.s32 %s9, 1
    %s15 = ssub.s32 %s9, 2
    %s16 = sadd.s32 %s9, 1
    %s17 = ssub.s32 %s9, %s16
    %p18 = scmp.eq.s32.totalorder %s17, 0
    %s20 = sadd.s32 %s19, 1
    %s21 = scalar_select %p18, %s19, %s20
    %p24 = pneg %p18
    %p25 = scmp.eq.s32.totalorder %s9, 1
    %p26 = por %p24, %p25
    %p27 = scmp.ne.s32.totalorder %s19, %s22
    %p28 = scmp.eq.s32.totalorder %s9, 0
    %p29 = por %p27, %p28
    %p30 = scmp.ne.s32.totalorder %s19, %s22
    %p31 = scmp.eq.s32.totalorder %s14, 1
    %p32 = por %p30, %p31
    %p33 = scmp.ne.s32.totalorder %s22, %s23
    %p34 = scmp.eq.s32.totalorder %s14, 0
    %p35 = por %p33, %p34
    %p36 = scmp.ne.s32.totalorder %s22, %s23
    %p37 = scmp.eq.s32.totalorder %s15, 1
    %p38 = por %p36, %p37
    %p40 = scmp.ne.s32.totalorder %s23, %s39
    %p41 = scmp.eq.s32.totalorder %s15, 0
    %p42 = por %p40, %p41
    %s44 = sadd.s32 %s43, 1
    %p47 = scmp.eq.s32.totalorder %s9, 1
    %p48 = scmp.ne.s32.totalorder %s43, %s45
    %p49 = scmp.eq.s32.totalorder %s9, 0
    %p50 = por %p48, %p49
    %p51 = scmp.ne.s32.totalorder %s43, %s45
    %p52 = scmp.eq.s32.totalorder %s14, 1
    %p53 = por %p51, %p52
    %p54 = scmp.ne.s32.totalorder %s45, %s46
    %p55 = scmp.eq.s32.totalorder %s14, 0
    %p56 = por %p54, %p55
    %p57 = scmp.ne.s32.totalorder %s45, %s46
    %p58 = scmp.eq.s32.totalorder %s15, 1
    %p59 = por %p57, %p58
    %p61 = scmp.ne.s32.totalorder %s46, %s60
    %p62 = scmp.eq.s32.totalorder %s15, 0
    %p63 = por %p61, %p62
    %s65 = sadd.s32 %s64, 1
    %p68 = scmp.eq.s32.totalorder %s9, 1
    %p69 = scmp.ne.s32.totalorder %s64, %s66
    %p70 = scmp.eq.s32.totalorder %s9, 0
    %p71 = por %p69, %p70
    %p72 = scmp.ne.s32.totalorder %s64, %s66
    %p73 = scmp.eq.s32.totalorder %s14, 1
    %p74 = por %p72, %p73
    %p75 = scmp.ne.s32.totalorder %s66, %s67
    %p76 = scmp.eq.s32.totalorder %s14, 0
    %p77 = por %p75, %p76
    %p78 = scmp.ne.s32.totalorder %s66, %s67
    %p79 = scmp.eq.s32.totalorder %s15, 1
    %p80 = por %p78, %p79
    %p82 = scmp.ne.s32.totalorder %s67, %s81
    %p83 = scmp.eq.s32.totalorder %s15, 0
    %p84 = por %p82, %p83
    %s85 = ssub.s32 %s9, %s16
    %p86 = scmp.eq.s32.totalorder %s85, 0
    %s88 = sadd.s32 %s87, 1
    %s89 = scalar_select %p86, %s87, %s88
    %p92 = pneg %p86
    %p93 = scmp.eq.s32.totalorder %s9, 1
    %p94 = por %p92, %p93
    %p95 = scmp.ne.s32.totalorder %s87, %s90
    %p96 = scmp.eq.s32.totalorder %s9, 0
    %p97 = por %p95, %p96
    %p98 = scmp.ne.s32.totalorder %s87, %s90
    %p99 = scmp.eq.s32.totalorder %s14, 1
    %p100 = por %p98, %p99
    %p101 = scmp.ne.s32.totalorder %s90, %s91
    %p102 = scmp.eq.s32.totalorder %s14, 0
    %p103 = por %p101, %p102
    %p104 = scmp.ne.s32.totalorder %s90, %s91
    %p105 = scmp.eq.s32.totalorder %s15, 1
    %p106 = por %p104, %p105
    %p108 = scmp.ne.s32.totalorder %s91, %s107
    %p109 = scmp.eq.s32.totalorder %s15, 0
    %p110 = por %p108, %p109
    %p111 = scmp.le.s32.totalorder 1, %s9
    %p112 = scmp.lt.s32.totalorder %s9, 3
    %p113 = pnand %p111, %p112
    %p114 = pneg %p113
    // Predicated region
    $region9: #{mbconv_forward.1} parent=5 // pred_check
      _
    $region10: #{mbconv_forward.1} parent=5 // pred_check_branch
      %116 = sbr.rel (%p113) target = $region12
    $region11: #{mbconv_forward.1} parent=5 // pred_region
      %s117 = ssub.s32 %s9, 1
      // Predicated region
      $region13: #{mbconv_forward.1} parent=11 // pred_check
        %p118 = pneg %p56
      $region14: #{mbconv_forward.1} parent=11 // pred_check_branch
        %120 = sbr.rel (%p118) target = $region16
      $region15: #{mbconv_forward.1} parent=11 // pred_region
        _
      $region16: #{mbconv_forward.1} parent=11 // pred_fallthru
        _
      // Predicated region
      $region17: #{mbconv_forward.1} parent=11 // pred_check
        %p121 = pneg %p77
      $region18: #{mbconv_forward.1} parent=11 // pred_check_branch
        %123 = sbr.rel (%p121) target = $region20
      $region19: #{mbconv_forward.1} parent=11 // pred_region
        _
      $region20: #{mbconv_forward.1} parent=11 // pred_fallthru
        _
    $region12: #{mbconv_forward.1} parent=5 // pred_fallthru
      _
    %p124 = scmp.lt.s32.totalorder %s9, 2
    // Predicated region
    $region21: #{mbconv_forward.1} parent=5 // pred_check
      %p125 = pneg %p124
    $region22: #{mbconv_forward.1} parent=5 // pred_check_branch
      %127 = sbr.rel (%p125) target = $region24
    $region23: #{mbconv_forward.1} parent=5 // pred_region
      // Predicated region
      $region25: #{mbconv_forward.1} parent=23 // pred_check
        %p128 = pneg %p29
      $region26: #{mbconv_forward.1} parent=23 // pred_check_branch
        %130 = sbr.rel (%p128) target = $region28
      $region27: #{mbconv_forward.1} parent=23 // pred_region
        %s131 = smul.u32 2, %s9
        %p132 = scmp.lt.s32.totalorder %s131, 3
        %s133 = scalar_select %p132, %s131, 3
        %s134 = smul.addr %s133, 2
        %s135 = smul.addr %s134, 8
        %s136 = scalar_lea.vmem %s0, %s135
        %s137 = smul.u32 2, %s9
      $region28: #{mbconv_forward.1} parent=23 // pred_fallthru
        _
    $region24: #{mbconv_forward.1} parent=5 // pred_fallthru
      _
    %p138 = scmp.le.s32.totalorder 1, %s9
    %p139 = scmp.lt.s32.totalorder %s9, 3
    %p140 = pnand %p138, %p139
    %p141 = pneg %p140
    // Predicated region
    $region29: #{mbconv_forward.1} parent=5 // pred_check
      _
    $region30: #{mbconv_forward.1} parent=5 // pred_check_branch
      %143 = sbr.rel (%p140) target = $region32
    $region31: #{mbconv_forward.1} parent=5 // pred_region
      %s144 = ssub.s32 %s9, 1
      %s145 = smul.u32 2, %s14
      %p146 = scmp.lt.s32.totalorder %s145, 3
      %s147 = scalar_select %p146, %s145, 3
      %s148 = smul.addr %s147, 2
      %s149 = smul.addr %s148, 8
      %s150 = scalar_lea.vmem %s0, %s149
      %p151 = pneg %p35
      %p152 = pneg %p32
      %p153 = pneg %p56
      %p154 = pneg %p53
      %p155 = pneg %p77
      %p156 = pneg %p74
      %p157 = pneg %p103
      %p158 = pneg %p100
      %s159 = smul.u32 2, %s14
      %p160 = scmp.lt.s32.totalorder %s159, 3
      %s161 = scalar_select %p160, %s159, 3
      %s162 = smul.addr %s161, 2
      %s163 = smul.addr %s162, 8
      %s164 = scalar_lea.vmem %s3, %s163
      %s165 = smul.u32 2, %s14
      %p166 = scmp.lt.s32.totalorder %s165, 3
      %s167 = scalar_select %p166, %s165, 3
      %s168 = smul.addr %s167, 2
      %s169 = smul.addr %s168, 8
      %s170 = scalar_lea.vmem %s0, %s169
      %s171 = smul.u32 2, %s14
      %s172 = smul.u32 2, %s14
      %p173 = scmp.lt.s32.totalorder %s172, 3
      %s174 = scalar_select %p173, %s172, 3
      %s175 = smul.addr %s174, 2
      %s176 = smul.addr %s175, 8
      %s177 = scalar_lea.vmem %s3, %s176
      %s178 = smul.u32 2, %s14
      %v180 = vld [vmem:[%s1] sm:$0xff]
      %v181 = vld [vmem:[%s1 + $0x8] sm:$0xff]
      %v182 = vld [vmem:[%s1 + $0x10] sm:$0xff]
      %v183 = vld [vmem:[%s1 + $0x18] sm:$0xff]
      %v184 = vld [vmem:[%s2] sm:$0xff]
      %v185 = vpack.c.bf16 %v181, %v180
      %v186 = vpack.c.bf16 %v183, %v182
      %v187 = vpack.c.bf16 %v184, %v184
      %v188 = vlaneseq
      %v189 = vand.u32 %v188, 127
      %v190 = vadd.s32 %v189, 128
      %v191 = vadd.s32 %v189, 256
      %v192 = vadd.s32 %v189, 15
      %v193 = vadd.s32 %v190, 15
      %v194 = vadd.s32 %v191, 15
      %vm195 = vcmp.lt.s32.totalorder %v192, 0
      %v196 = vsub.s32 0, %v192
      %v197 = vsel %vm195, %v196, %v192
      %v198 = vshrl.u32 %v197, 4
      %v199 = vand.u32 %v197, 15
      %v200 = vsub.s32 0, %v199
      %v201 = vsel %vm195, %v200, %v199
      %vm202 = vcmp.lt.s32.totalorder %v193, 0
      %v203 = vsub.s32 0, %v193
      %v204 = vsel %vm202, %v203, %v193
      %v205 = vshrl.u32 %v204, 4
      %v206 = vand.u32 %v204, 15
      %v207 = vsub.s32 0, %v206
      %v208 = vsel %vm202, %v207, %v206
      %vm209 = vcmp.lt.s32.totalorder %v194, 0
      %v210 = vsub.s32 0, %v194
      %v211 = vsel %vm209, %v210, %v194
      %v212 = vshrl.u32 %v211, 4
      %v213 = vand.u32 %v211, 15
      %v214 = vsub.s32 0, %v213
      %v215 = vsel %vm209, %v214, %v213
      %vm216 = vcmp.ne.s32.totalorder %v201, 0
      %vm217 = vcmp.ne.s32.totalorder %v208, 0
      %vm218 = vcmp.ne.s32.totalorder %v215, 0
      %vm219 = vcmp.lt.s32.totalorder %v201, 0
      %vm220 = vcmp.lt.s32.totalorder %v208, 0
      %vm221 = vcmp.lt.s32.totalorder %v215, 0
      %vm222 = vmand %vm219, %vm216
      %vm223 = vmand %vm220, %vm217
      %vm224 = vmand %vm221, %vm218
      %v225 = vadd.s32 %v201, 16
      %v226 = vadd.s32 %v208, 16
      %v227 = vadd.s32 %v215, 16
      %v228 = vsel %vm222, %v225, %v201
      %v229 = vsel %vm223, %v226, %v208
      %v230 = vsel %vm224, %v227, %v215
      %v231 = vld [vmem:[%s170] sm:$0xff]
      %v232 = vld [vmem:[%s170 + $0x8] sm:$0xff]
      %v233 = vpack.c.bf16 %v231, %v231
      %v234 = vpack.c.bf16 %v232, %v232
      %236 = vset.pattern.permute.xlu0 8
      %237 = vperm.xlu0 %236, %v180
      %v238 = vpop.permute.xlu0 %237
      %241 = vset.pattern.permute.xlu0 8
      %242 = vperm.xlu0 %241, %v181
      %v243 = vpop.permute.xlu0 %242
      %246 = vset.pattern.permute.xlu0 8
      %247 = vperm.xlu0 %246, %v182
      %v248 = vpop.permute.xlu0 %247
      %251 = vset.pattern.permute.xlu0 8
      %252 = vperm.xlu0 %251, %v183
      %v253 = vpop.permute.xlu0 %252
      %vm255 = vcmask 64512
      %v257 = vsel %vm255, %v185, 0
      %v260 = vsel %vm255, %v186, 0
      %vm262 = vcmask 1043456
      %v264 = vsel %vm262, %v233, 0
      %v267 = vsel %vm262, %v234, 0
      %269 = vmatpush.bf16.msra.mxu0 0
      %270 = vmatpush.bf16.msra.mxu0 0
      %271 = vmatpush.bf16.msra.mxu0 0
      %272 = vmatpush.bf16.msra.mxu0 0
      %273 = vmatpush.bf16.msra.mxu0 0
      %274 = vmatpush.bf16.msra.mxu0 0
      %275 = vmatpush.bf16.msra.mxu0 0
      %276 = vmatpush.bf16.msra.mxu0 %v264
      %277 = vmatmul.bf16.gmra.mxu0 %v257
      %v278 = vpop.f32.mrf.mxu0
      %v279 = vadd.f32 %v238, %v278
      %v280 = vpop.f32.mrf.mxu0
      %v281 = vadd.f32 %v243, %v280
      %282 = vmatmul.bf16.gmra.mxu0 %v260
      %v283 = vpop.f32.mrf.mxu0
      %v284 = vadd.f32 %v248, %v283
      %v285 = vpop.f32.mrf.mxu0
      %v286 = vadd.f32 %v253, %v285
      %287 = vdwg.mxu0
      %288 = vmatpush.bf16.msra.mxu0 0
      %289 = vmatpush.bf16.msra.mxu0 0
      %290 = vmatpush.bf16.msra.mxu0 0
      %291 = vmatpush.bf16.msra.mxu0 0
      %292 = vmatpush.bf16.msra.mxu0 0
      %293 = vmatpush.bf16.msra.mxu0 0
      %294 = vmatpush.bf16.msra.mxu0 0
      %295 = vmatpush.bf16.msra.mxu0 %v267
      %296 = vmatmul.bf16.gmra.mxu0 %v257
      %v297 = vpop.f32.mrf.mxu0
      %v298 = vadd.f32 %v238, %v297
      %v299 = vpop.f32.mrf.mxu0
      %v300 = vadd.f32 %v243, %v299
      %301 = vmatmul.bf16.gmra.mxu0 %v260
      %v302 = vpop.f32.mrf.mxu0
      %v303 = vadd.f32 %v248, %v302
      %v304 = vpop.f32.mrf.mxu0
      %v305 = vadd.f32 %v253, %v304
      %306 = vdwg.mxu0
      %v307 = vmul.f32 %v279, %v279
      %v308 = vmul.f32 %v298, %v298
      %v309 = vmul.f32 %v281, %v281
      %v310 = vmul.f32 %v300, %v300
      %v311 = vmul.f32 %v284, %v284
      %v312 = vmul.f32 %v303, %v303
      %v313 = vmul.f32 %v286, %v286
      %v314 = vmul.f32 %v305, %v305
      %v315 = vmul.f32 %v279, %v307
      %v316 = vmul.f32 %v298, %v308
      %v317 = vmul.f32 %v281, %v309
      %v318 = vmul.f32 %v300, %v310
      %v319 = vmul.f32 %v284, %v311
      %v320 = vmul.f32 %v303, %v312
      %v321 = vmul.f32 %v286, %v313
      %v322 = vmul.f32 %v305, %v314
      %v323 = vmul.f32 %v315, 0.044715
      %v324 = vmul.f32 %v316, 0.044715
      %v325 = vmul.f32 %v317, 0.044715
      %v326 = vmul.f32 %v318, 0.044715
      %v327 = vmul.f32 %v319, 0.044715
      %v328 = vmul.f32 %v320, 0.044715
      %v329 = vmul.f32 %v321, 0.044715
      %v330 = vmul.f32 %v322, 0.044715
      %v331 = vadd.f32 %v279, %v323
      %v332 = vadd.f32 %v298, %v324
      %v333 = vadd.f32 %v281, %v325
      %v334 = vadd.f32 %v300, %v326
      %v335 = vadd.f32 %v284, %v327
      %v336 = vadd.f32 %v303, %v328
      %v337 = vadd.f32 %v286, %v329
      %v338 = vadd.f32 %v305, %v330
      %v339 = vmul.f32 %v331, 0.7978846
      %v340 = vmul.f32 %v332, 0.7978846
      %v341 = vmul.f32 %v333, 0.7978846
      %v342 = vmul.f32 %v334, 0.7978846
      %v343 = vmul.f32 %v335, 0.7978846
      %v344 = vmul.f32 %v336, 0.7978846
      %v345 = vmul.f32 %v337, 0.7978846
      %v346 = vmul.f32 %v338, 0.7978846
      %v347 = vtanh.pop %v339
      %v348 = vtanh.pop %v340
      %v349 = vtanh.pop %v341
      %v350 = vtanh.pop %v342
      %v351 = vtanh.pop %v343
      %v352 = vtanh.pop %v344
      %v353 = vtanh.pop %v345
      %v354 = vtanh.pop %v346
      %v355 = vadd.f32 %v347, 1.0
      %v356 = vadd.f32 %v348, 1.0
      %v357 = vadd.f32 %v349, 1.0
      %v358 = vadd.f32 %v350, 1.0
      %v359 = vadd.f32 %v351, 1.0
      %v360 = vadd.f32 %v352, 1.0
      %v361 = vadd.f32 %v353, 1.0
      %v362 = vadd.f32 %v354, 1.0
      %v363 = vmul.f32 %v355, 0.5
      %v364 = vmul.f32 %v356, 0.5
      %v365 = vmul.f32 %v357, 0.5
      %v366 = vmul.f32 %v358, 0.5
      %v367 = vmul.f32 %v359, 0.5
      %v368 = vmul.f32 %v360, 0.5
      %v369 = vmul.f32 %v361, 0.5
      %v370 = vmul.f32 %v362, 0.5
      %v371 = vmul.f32 %v279, %v363
      %v372 = vmul.f32 %v298, %v364
      %v373 = vmul.f32 %v281, %v365
      %v374 = vmul.f32 %v300, %v366
      %v375 = vmul.f32 %v284, %v367
      %v376 = vmul.f32 %v303, %v368
      %v377 = vmul.f32 %v286, %v369
      %v378 = vmul.f32 %v305, %v370
      %387 = vrot.lane.b32.xlu0 %v371, 17
      %v388 = vpop.permute.xlu0 %387
      %389 = vrot.lane.b32.xlu0 %v372, 17
      %v390 = vpop.permute.xlu0 %389
      %391 = vrot.lane.b32.xlu0 %v373, 17
      %v392 = vpop.permute.xlu0 %391
      %393 = vrot.lane.b32.xlu0 %v374, 17
      %v394 = vpop.permute.xlu0 %393
      %395 = vrot.lane.b32.xlu0 %v375, 17
      %v396 = vpop.permute.xlu0 %395
      %397 = vrot.lane.b32.xlu0 %v376, 17
      %v398 = vpop.permute.xlu0 %397
      %399 = vrot.lane.b32.xlu0 %v377, 17
      %v400 = vpop.permute.xlu0 %399
      %401 = vrot.lane.b32.xlu0 %v378, 17
      %v402 = vpop.permute.xlu0 %401
      %vm403 = vcmask 138240
      %v404 = vsel %vm403, %v388, %v390
      %v405 = vsel %vm403, %v392, %v394
      %v406 = vsel %vm403, %v396, %v398
      %v407 = vsel %vm403, %v400, %v402
      %v420 = vsel %vm403, 0.0, %v388
      %v421 = vsel %vm403, 0.0, %v392
      %v422 = vsel %vm403, 0.0, %v396
      %v423 = vsel %vm403, 0.0, %v400
      %v424 = vsel %vm403, %v390, 0.0
      %v425 = vsel %vm403, %v394, 0.0
      %v426 = vsel %vm403, %v398, 0.0
      %v427 = vsel %vm403, %v402, 0.0
      %vm428 = vcmp.lt.s32.totalorder %v228, 15
      %vm429 = vcmp.lt.s32.totalorder %v229, 15
      %vm430 = vcmp.lt.s32.totalorder %v230, 15
      %v431 = vsel %vm428, 1, 0
      %v432 = vsel %vm429, 1, 0
      %v433 = vsel %vm430, 1, 0
      %vm434 = vcmp.eq.s32.totalorder %v431, 1
      %vm435 = vcmp.eq.s32.totalorder %v432, 1
      %vm436 = vcmp.eq.s32.totalorder %v433, 1
      %v437 = vsel %vm434, %v420, 0.0
      %v438 = vsel %vm435, %v404, 0.0
      %v439 = vsel %vm436, %v424, 0.0
      %v440 = vsel %vm434, %v421, 0.0
      %v441 = vsel %vm435, %v405, 0.0
      %v442 = vsel %vm436, %v425, 0.0
      %v443 = vsel %vm434, %v422, 0.0
      %v444 = vsel %vm435, %v406, 0.0
      %v445 = vsel %vm436, %v426, 0.0
      %v446 = vsel %vm434, %v423, 0.0
      %v447 = vsel %vm435, %v407, 0.0
      %v448 = vsel %vm436, %v427, 0.0
      %vm449 = vcmp.ge.s32.totalorder %v228, 1
      %vm450 = vcmp.ge.s32.totalorder %v229, 1
      %vm451 = vcmp.ge.s32.totalorder %v230, 1
      %v452 = vsel %vm449, 1, 0
      %v453 = vsel %vm450, 1, 0
      %v454 = vsel %vm451, 1, 0
      %vm455 = vcmp.eq.s32.totalorder %v452, 1
      %vm456 = vcmp.eq.s32.totalorder %v453, 1
      %vm457 = vcmp.eq.s32.totalorder %v454, 1
      %v458 = vsel %vm455, %v420, 0.0
      %v459 = vsel %vm456, %v404, 0.0
      %v460 = vsel %vm457, %v424, 0.0
      %v461 = vsel %vm455, %v421, 0.0
      %v462 = vsel %vm456, %v405, 0.0
      %v463 = vsel %vm457, %v425, 0.0
      %v464 = vsel %vm455, %v422, 0.0
      %v465 = vsel %vm456, %v406, 0.0
      %v466 = vsel %vm457, %v426, 0.0
      %v467 = vsel %vm455, %v423, 0.0
      %v468 = vsel %vm456, %v407, 0.0
      %v469 = vsel %vm457, %v427, 0.0
      %470 = vset.pattern.permute.xlu0 9
      %471 = vperm.xlu0 %470, %v180
      %v472 = vpop.permute.xlu0 %471
      %474 = vset.pattern.permute.xlu0 9
      %475 = vperm.xlu0 %474, %v181
      %v476 = vpop.permute.xlu0 %475
      %478 = vset.pattern.permute.xlu0 9
      %479 = vperm.xlu0 %478, %v182
      %v480 = vpop.permute.xlu0 %479
      %482 = vset.pattern.permute.xlu0 9
      %483 = vperm.xlu0 %482, %v183
      %v484 = vpop.permute.xlu0 %483
      %v486 = vmul.f32 %v437, %v472
      %v487 = vmul.f32 %v438, %v472
      %v488 = vmul.f32 %v440, %v476
      %v489 = vmul.f32 %v441, %v476
      %v490 = vmul.f32 %v443, %v480
      %v491 = vmul.f32 %v444, %v480
      %v492 = vmul.f32 %v446, %v484
      %v493 = vmul.f32 %v447, %v484
      %v494 = vadd.f32 %v486, 0.0
      %v495 = vadd.f32 %v487, 0.0
      %v496 = vadd.f32 %v488, 0.0
      %v497 = vadd.f32 %v489, 0.0
      %v498 = vadd.f32 %v490, 0.0
      %v499 = vadd.f32 %v491, 0.0
      %v500 = vadd.f32 %v492, 0.0
      %v501 = vadd.f32 %v493, 0.0
      %502 = vset.pattern.permute.xlu0 10
      %503 = vperm.xlu0 %502, %v180
      %v504 = vpop.permute.xlu0 %503
      %506 = vset.pattern.permute.xlu0 10
      %507 = vperm.xlu0 %506, %v181
      %v508 = vpop.permute.xlu0 %507
      %510 = vset.pattern.permute.xlu0 10
      %511 = vperm.xlu0 %510, %v182
      %v512 = vpop.permute.xlu0 %511
      %514 = vset.pattern.permute.xlu0 10
      %515 = vperm.xlu0 %514, %v183
      %v516 = vpop.permute.xlu0 %515
      %v518 = vmul.f32 %v420, %v504
      %v519 = vmul.f32 %v404, %v504
      %v520 = vmul.f32 %v424, %v504
      %v521 = vmul.f32 %v421, %v508
      %v522 = vmul.f32 %v405, %v508
      %v523 = vmul.f32 %v425, %v508
      %v524 = vmul.f32 %v422, %v512
      %v525 = vmul.f32 %v406, %v512
      %v526 = vmul.f32 %v426, %v512
      %v527 = vmul.f32 %v423, %v516
      %v528 = vmul.f32 %v407, %v516
      %v529 = vmul.f32 %v427, %v516
      %542 = vrot.lane.b32.xlu0 %v518, 127
      %v543 = vpop.permute.xlu0 %542
      %544 = vrot.lane.b32.xlu0 %v519, 127
      %v545 = vpop.permute.xlu0 %544
      %546 = vrot.lane.b32.xlu0 %v520, 127
      %v547 = vpop.permute.xlu0 %546
      %548 = vrot.lane.b32.xlu0 %v521, 127
      %v549 = vpop.permute.xlu0 %548
      %550 = vrot.lane.b32.xlu0 %v522, 127
      %v551 = vpop.permute.xlu0 %550
      %552 = vrot.lane.b32.xlu0 %v523, 127
      %v553 = vpop.permute.xlu0 %552
      %554 = vrot.lane.b32.xlu0 %v524, 127
      %v555 = vpop.permute.xlu0 %554
      %556 = vrot.lane.b32.xlu0 %v525, 127
      %v557 = vpop.permute.xlu0 %556
      %558 = vrot.lane.b32.xlu0 %v526, 127
      %v559 = vpop.permute.xlu0 %558
      %560 = vrot.lane.b32.xlu0 %v527, 127
      %v561 = vpop.permute.xlu0 %560
      %562 = vrot.lane.b32.xlu0 %v528, 127
      %v563 = vpop.permute.xlu0 %562
      %564 = vrot.lane.b32.xlu0 %v529, 127
      %v565 = vpop.permute.xlu0 %564
      %vm566 = vcmask 1039360
      %v567 = vsel %vm566, %v543, %v545
      %v568 = vsel %vm566, %v545, %v547
      %v569 = vsel %vm566, %v549, %v551
      %v570 = vsel %vm566, %v551, %v553
      %v571 = vsel %vm566, %v555, %v557
      %v572 = vsel %vm566, %v557, %v559
      %v573 = vsel %vm566, %v561, %v563
      %v574 = vsel %vm566, %v563, %v565
      %v583 = vadd.f32 %v494, %v567
      %v584 = vadd.f32 %v495, %v568
      %v585 = vadd.f32 %v496, %v569
      %v586 = vadd.f32 %v497, %v570
      %v587 = vadd.f32 %v498, %v571
      %v588 = vadd.f32 %v499, %v572
      %v589 = vadd.f32 %v500, %v573
      %v590 = vadd.f32 %v501, %v574
      %591 = vset.pattern.permute.xlu0 11
      %592 = vperm.xlu0 %591, %v180
      %v593 = vpop.permute.xlu0 %592
      %595 = vset.pattern.permute.xlu0 11
      %596 = vperm.xlu0 %595, %v181
      %v597 = vpop.permute.xlu0 %596
      %599 = vset.pattern.permute.xlu0 11
      %600 = vperm.xlu0 %599, %v182
      %v601 = vpop.permute.xlu0 %600
      %603 = vset.pattern.permute.xlu0 11
      %604 = vperm.xlu0 %603, %v183
      %v605 = vpop.permute.xlu0 %604
      %v607 = vmul.f32 %v458, %v593
      %v608 = vmul.f32 %v459, %v593
      %v609 = vmul.f32 %v460, %v593
      %v610 = vmul.f32 %v461, %v597
      %v611 = vmul.f32 %v462, %v597
      %v612 = vmul.f32 %v463, %v597
      %v613 = vmul.f32 %v464, %v601
      %v614 = vmul.f32 %v465, %v601
      %v615 = vmul.f32 %v466, %v601
      %v616 = vmul.f32 %v467, %v605
      %v617 = vmul.f32 %v468, %v605
      %v618 = vmul.f32 %v469, %v605
      %631 = vrot.lane.b32.xlu0 %v607, 126
      %v632 = vpop.permute.xlu0 %631
      %633 = vrot.lane.b32.xlu0 %v608, 126
      %v634 = vpop.permute.xlu0 %633
      %635 = vrot.lane.b32.xlu0 %v609, 126
      %v636 = vpop.permute.xlu0 %635
      %637 = vrot.lane.b32.xlu0 %v610, 126
      %v638 = vpop.permute.xlu0 %637
      %639 = vrot.lane.b32.xlu0 %v611, 126
      %v640 = vpop.permute.xlu0 %639
      %641 = vrot.lane.b32.xlu0 %v612, 126
      %v642 = vpop.permute.xlu0 %641
      %643 = vrot.lane.b32.xlu0 %v613, 126
      %v644 = vpop.permute.xlu0 %643
      %645 = vrot.lane.b32.xlu0 %v614, 126
      %v646 = vpop.permute.xlu0 %645
      %647 = vrot.lane.b32.xlu0 %v615, 126
      %v648 = vpop.permute.xlu0 %647
      %649 = vrot.lane.b32.xlu0 %v616, 126
      %v650 = vpop.permute.xlu0 %649
      %651 = vrot.lane.b32.xlu0 %v617, 126
      %v652 = vpop.permute.xlu0 %651
      %653 = vrot.lane.b32.xlu0 %v618, 126
      %v654 = vpop.permute.xlu0 %653
      %vm655 = vcmask 1031168
      %v656 = vsel %vm655, %v632, %v634
      %v657 = vsel %vm655, %v634, %v636
      %v658 = vsel %vm655, %v638, %v640
      %v659 = vsel %vm655, %v640, %v642
      %v660 = vsel %vm655, %v644, %v646
      %v661 = vsel %vm655, %v646, %v648
      %v662 = vsel %vm655, %v650, %v652
      %v663 = vsel %vm655, %v652, %v654
      %v672 = vadd.f32 %v583, %v656
      %v673 = vadd.f32 %v584, %v657
      %v674 = vadd.f32 %v585, %v658
      %v675 = vadd.f32 %v586, %v659
      %v676 = vadd.f32 %v587, %v660
      %v677 = vadd.f32 %v588, %v661
      %v678 = vadd.f32 %v589, %v662
      %v679 = vadd.f32 %v590, %v663
      %680 = vset.pattern.permute.xlu0 12
      %681 = vperm.xlu0 %680, %v180
      %v682 = vpop.permute.xlu0 %681
      %684 = vset.pattern.permute.xlu0 12
      %685 = vperm.xlu0 %684, %v181
      %v686 = vpop.permute.xlu0 %685
      %688 = vset.pattern.permute.xlu0 12
      %689 = vperm.xlu0 %688, %v182
      %v690 = vpop.permute.xlu0 %689
      %692 = vset.pattern.permute.xlu0 12
      %693 = vperm.xlu0 %692, %v183
      %v694 = vpop.permute.xlu0 %693
      %v696 = vmul.f32 %v437, %v682
      %v697 = vmul.f32 %v438, %v682
      %v698 = vmul.f32 %v439, %v682
      %v699 = vmul.f32 %v440, %v686
      %v700 = vmul.f32 %v441, %v686
      %v701 = vmul.f32 %v442, %v686
      %v702 = vmul.f32 %v443, %v690
      %v703 = vmul.f32 %v444, %v690
      %v704 = vmul.f32 %v445, %v690
      %v705 = vmul.f32 %v446, %v694
      %v706 = vmul.f32 %v447, %v694
      %v707 = vmul.f32 %v448, %v694
      %720 = vrot.lane.b32.xlu0 %v696, 112
      %v721 = vpop.permute.xlu0 %720
      %722 = vrot.lane.b32.xlu0 %v697, 112
      %v723 = vpop.permute.xlu0 %722
      %724 = vrot.lane.b32.xlu0 %v698, 112
      %v725 = vpop.permute.xlu0 %724
      %726 = vrot.lane.b32.xlu0 %v699, 112
      %v727 = vpop.permute.xlu0 %726
      %728 = vrot.lane.b32.xlu0 %v700, 112
      %v729 = vpop.permute.xlu0 %728
      %730 = vrot.lane.b32.xlu0 %v701, 112
      %v731 = vpop.permute.xlu0 %730
      %732 = vrot.lane.b32.xlu0 %v702, 112
      %v733 = vpop.permute.xlu0 %732
      %734 = vrot.lane.b32.xlu0 %v703, 112
      %v735 = vpop.permute.xlu0 %734
      %736 = vrot.lane.b32.xlu0 %v704, 112
      %v737 = vpop.permute.xlu0 %736
      %738 = vrot.lane.b32.xlu0 %v705, 112
      %v739 = vpop.permute.xlu0 %738
      %740 = vrot.lane.b32.xlu0 %v706, 112
      %v741 = vpop.permute.xlu0 %740
      %742 = vrot.lane.b32.xlu0 %v707, 112
      %v743 = vpop.permute.xlu0 %742
      %vm744 = vcmask 916480
      %v745 = vsel %vm744, %v721, %v723
      %v746 = vsel %vm744, %v723, %v725
      %v747 = vsel %vm744, %v727, %v729
      %v748 = vsel %vm744, %v729, %v731
      %v749 = vsel %vm744, %v733, %v735
      %v750 = vsel %vm744, %v735, %v737
      %v751 = vsel %vm744, %v739, %v741
      %v752 = vsel %vm744, %v741, %v743
      %v761 = vadd.f32 %v672, %v745
      %v762 = vadd.f32 %v673, %v746
      %v763 = vadd.f32 %v674, %v747
      %v764 = vadd.f32 %v675, %v748
      %v765 = vadd.f32 %v676, %v749
      %v766 = vadd.f32 %v677, %v750
      %v767 = vadd.f32 %v678, %v751
      %v768 = vadd.f32 %v679, %v752
      %769 = vset.pattern.permute.xlu0 13
      %770 = vperm.xlu0 %769, %v180
      %v771 = vpop.permute.xlu0 %770
      %773 = vset.pattern.permute.xlu0 13
      %774 = vperm.xlu0 %773, %v181
      %v775 = vpop.permute.xlu0 %774
      %777 = vset.pattern.permute.xlu0 13
      %778 = vperm.xlu0 %777, %v182
      %v779 = vpop.permute.xlu0 %778
      %781 = vset.pattern.permute.xlu0 13
      %782 = vperm.xlu0 %781, %v183
      %v783 = vpop.permute.xlu0 %782
      %v785 = vmul.f32 %v420, %v771
      %v786 = vmul.f32 %v404, %v771
      %v787 = vmul.f32 %v424, %v771
      %v788 = vmul.f32 %v421, %v775
      %v789 = vmul.f32 %v405, %v775
      %v790 = vmul.f32 %v425, %v775
      %v791 = vmul.f32 %v422, %v779
      %v792 = vmul.f32 %v406, %v779
      %v793 = vmul.f32 %v426, %v779
      %v794 = vmul.f32 %v423, %v783
      %v795 = vmul.f32 %v407, %v783
      %v796 = vmul.f32 %v427, %v783
      %809 = vrot.lane.b32.xlu0 %v785, 111
      %v810 = vpop.permute.xlu0 %809
      %811 = vrot.lane.b32.xlu0 %v786, 111
      %v812 = vpop.permute.xlu0 %811
      %813 = vrot.lane.b32.xlu0 %v787, 111
      %v814 = vpop.permute.xlu0 %813
      %815 = vrot.lane.b32.xlu0 %v788, 111
      %v816 = vpop.permute.xlu0 %815
      %817 = vrot.lane.b32.xlu0 %v789, 111
      %v818 = vpop.permute.xlu0 %817
      %819 = vrot.lane.b32.xlu0 %v790, 111
      %v820 = vpop.permute.xlu0 %819
      %821 = vrot.lane.b32.xlu0 %v791, 111
      %v822 = vpop.permute.xlu0 %821
      %823 = vrot.lane.b32.xlu0 %v792, 111
      %v824 = vpop.permute.xlu0 %823
      %825 = vrot.lane.b32.xlu0 %v793, 111
      %v826 = vpop.permute.xlu0 %825
      %827 = vrot.lane.b32.xlu0 %v794, 111
      %v828 = vpop.permute.xlu0 %827
      %829 = vrot.lane.b32.xlu0 %v795, 111
      %v830 = vpop.permute.xlu0 %829
      %831 = vrot.lane.b32.xlu0 %v796, 111
      %v832 = vpop.permute.xlu0 %831
      %vm833 = vcmask 908288
      %v834 = vsel %vm833, %v810, %v812
      %v835 = vsel %vm833, %v812, %v814
      %v836 = vsel %vm833, %v816, %v818
      %v837 = vsel %vm833, %v818, %v820
      %v838 = vsel %vm833, %v822, %v824
      %v839 = vsel %vm833, %v824, %v826
      %v840 = vsel %vm833, %v828, %v830
      %v841 = vsel %vm833, %v830, %v832
      %v850 = vadd.f32 %v761, %v834
      %v851 = vadd.f32 %v762, %v835
      %v852 = vadd.f32 %v763, %v836
      %v853 = vadd.f32 %v764, %v837
      %v854 = vadd.f32 %v765, %v838
      %v855 = vadd.f32 %v766, %v839
      %v856 = vadd.f32 %v767, %v840
      %v857 = vadd.f32 %v768, %v841
      %858 = vset.pattern.permute.xlu0 14
      %859 = vperm.xlu0 %858, %v180
      %v860 = vpop.permute.xlu0 %859
      %862 = vset.pattern.permute.xlu0 14
      %863 = vperm.xlu0 %862, %v181
      %v864 = vpop.permute.xlu0 %863
      %866 = vset.pattern.permute.xlu0 14
      %867 = vperm.xlu0 %866, %v182
      %v868 = vpop.permute.xlu0 %867
      %870 = vset.pattern.permute.xlu0 14
      %871 = vperm.xlu0 %870, %v183
      %v872 = vpop.permute.xlu0 %871
      %v874 = vmul.f32 %v458, %v860
      %v875 = vmul.f32 %v459, %v860
      %v876 = vmul.f32 %v460, %v860
      %v877 = vmul.f32 %v461, %v864
      %v878 = vmul.f32 %v462, %v864
      %v879 = vmul.f32 %v463, %v864
      %v880 = vmul.f32 %v464, %v868
      %v881 = vmul.f32 %v465, %v868
      %v882 = vmul.f32 %v466, %v868
      %v883 = vmul.f32 %v467, %v872
      %v884 = vmul.f32 %v468, %v872
      %v885 = vmul.f32 %v469, %v872
      %898 = vrot.lane.b32.xlu0 %v874, 110
      %v899 = vpop.permute.xlu0 %898
      %900 = vrot.lane.b32.xlu0 %v875, 110
      %v901 = vpop.permute.xlu0 %900
      %902 = vrot.lane.b32.xlu0 %v876, 110
      %v903 = vpop.permute.xlu0 %902
      %904 = vrot.lane.b32.xlu0 %v877, 110
      %v905 = vpop.permute.xlu0 %904
      %906 = vrot.lane.b32.xlu0 %v878, 110
      %v907 = vpop.permute.xlu0 %906
      %908 = vrot.lane.b32.xlu0 %v879, 110
      %v909 = vpop.permute.xlu0 %908
      %910 = vrot.lane.b32.xlu0 %v880, 110
      %v911 = vpop.permute.xlu0 %910
      %912 = vrot.lane.b32.xlu0 %v881, 110
      %v913 = vpop.permute.xlu0 %912
      %914 = vrot.lane.b32.xlu0 %v882, 110
      %v915 = vpop.permute.xlu0 %914
      %916 = vrot.lane.b32.xlu0 %v883, 110
      %v917 = vpop.permute.xlu0 %916
      %918 = vrot.lane.b32.xlu0 %v884, 110
      %v919 = vpop.permute.xlu0 %918
      %920 = vrot.lane.b32.xlu0 %v885, 110
      %v921 = vpop.permute.xlu0 %920
      %vm922 = vcmask 900096
      %v923 = vsel %vm922, %v899, %v901
      %v924 = vsel %vm922, %v901, %v903
      %v925 = vsel %vm922, %v905, %v907
      %v926 = vsel %vm922, %v907, %v909
      %v927 = vsel %vm922, %v911, %v913
      %v928 = vsel %vm922, %v913, %v915
      %v929 = vsel %vm922, %v917, %v919
      %v930 = vsel %vm922, %v919, %v921
      %v939 = vadd.f32 %v850, %v923
      %v940 = vadd.f32 %v851, %v924
      %v941 = vadd.f32 %v852, %v925
      %v942 = vadd.f32 %v853, %v926
      %v943 = vadd.f32 %v854, %v927
      %v944 = vadd.f32 %v855, %v928
      %v945 = vadd.f32 %v856, %v929
      %v946 = vadd.f32 %v857, %v930
      %947 = vset.pattern.permute.xlu0 15
      %948 = vperm.xlu0 %947, %v180
      %v949 = vpop.permute.xlu0 %948
      %951 = vset.pattern.permute.xlu0 15
      %952 = vperm.xlu0 %951, %v181
      %v953 = vpop.permute.xlu0 %952
      %955 = vset.pattern.permute.xlu0 15
      %956 = vperm.xlu0 %955, %v182
      %v957 = vpop.permute.xlu0 %956
      %959 = vset.pattern.permute.xlu0 15
      %960 = vperm.xlu0 %959, %v183
      %v961 = vpop.permute.xlu0 %960
      %v963 = vmul.f32 %v437, %v949
      %v964 = vmul.f32 %v438, %v949
      %v965 = vmul.f32 %v439, %v949
      %v966 = vmul.f32 %v440, %v953
      %v967 = vmul.f32 %v441, %v953
      %v968 = vmul.f32 %v442, %v953
      %v969 = vmul.f32 %v443, %v957
      %v970 = vmul.f32 %v444, %v957
      %v971 = vmul.f32 %v445, %v957
      %v972 = vmul.f32 %v446, %v961
      %v973 = vmul.f32 %v447, %v961
      %v974 = vmul.f32 %v448, %v961
      %987 = vrot.lane.b32.xlu0 %v963, 96
      %v988 = vpop.permute.xlu0 %987
      %989 = vrot.lane.b32.xlu0 %v964, 96
      %v990 = vpop.permute.xlu0 %989
      %991 = vrot.lane.b32.xlu0 %v965, 96
      %v992 = vpop.permute.xlu0 %991
      %993 = vrot.lane.b32.xlu0 %v966, 96
      %v994 = vpop.permute.xlu0 %993
      %995 = vrot.lane.b32.xlu0 %v967, 96
      %v996 = vpop.permute.xlu0 %995
      %997 = vrot.lane.b32.xlu0 %v968, 96
      %v998 = vpop.permute.xlu0 %997
      %999 = vrot.lane.b32.xlu0 %v969, 96
      %v1000 = vpop.permute.xlu0 %999
      %1001 = vrot.lane.b32.xlu0 %v970, 96
      %v1002 = vpop.permute.xlu0 %1001
      %1003 = vrot.lane.b32.xlu0 %v971, 96
      %v1004 = vpop.permute.xlu0 %1003
      %1005 = vrot.lane.b32.xlu0 %v972, 96
      %v1006 = vpop.permute.xlu0 %1005
      %1007 = vrot.lane.b32.xlu0 %v973, 96
      %v1008 = vpop.permute.xlu0 %1007
      %1009 = vrot.lane.b32.xlu0 %v974, 96
      %v1010 = vpop.permute.xlu0 %1009
      %vm1011 = vcmask 785408
      %v1012 = vsel %vm1011, %v988, %v990
      %v1013 = vsel %vm1011, %v990, %v992
      %v1014 = vsel %vm1011, %v994, %v996
      %v1015 = vsel %vm1011, %v996, %v998
      %v1016 = vsel %vm1011, %v1000, %v1002
      %v1017 = vsel %vm1011, %v1002, %v1004
      %v1018 = vsel %vm1011, %v1006, %v1008
      %v1019 = vsel %vm1011, %v1008, %v1010
      %v1028 = vadd.f32 %v939, %v1012
      %v1029 = vadd.f32 %v940, %v1013
      %v1030 = vadd.f32 %v941, %v1014
      %v1031 = vadd.f32 %v942, %v1015
      %v1032 = vadd.f32 %v943, %v1016
      %v1033 = vadd.f32 %v944, %v1017
      %v1034 = vadd.f32 %v945, %v1018
      %v1035 = vadd.f32 %v946, %v1019
      %1036 = vset.pattern.permute.xlu0 16
      %1037 = vperm.xlu0 %1036, %v180
      %v1038 = vpop.permute.xlu0 %1037
      %1040 = vset.pattern.permute.xlu0 16
      %1041 = vperm.xlu0 %1040, %v181
      %v1042 = vpop.permute.xlu0 %1041
      %1044 = vset.pattern.permute.xlu0 16
      %1045 = vperm.xlu0 %1044, %v182
      %v1046 = vpop.permute.xlu0 %1045
      %1048 = vset.pattern.permute.xlu0 16
      %1049 = vperm.xlu0 %1048, %v183
      %v1050 = vpop.permute.xlu0 %1049
      %v1052 = vmul.f32 %v420, %v1038
      %v1053 = vmul.f32 %v404, %v1038
      %v1054 = vmul.f32 %v424, %v1038
      %v1055 = vmul.f32 %v421, %v1042
      %v1056 = vmul.f32 %v405, %v1042
      %v1057 = vmul.f32 %v425, %v1042
      %v1058 = vmul.f32 %v422, %v1046
      %v1059 = vmul.f32 %v406, %v1046
      %v1060 = vmul.f32 %v426, %v1046
      %v1061 = vmul.f32 %v423, %v1050
      %v1062 = vmul.f32 %v407, %v1050
      %v1063 = vmul.f32 %v427, %v1050
      %1076 = vrot.lane.b32.xlu0 %v1052, 95
      %v1077 = vpop.permute.xlu0 %1076
      %1078 = vrot.lane.b32.xlu0 %v1053, 95
      %v1079 = vpop.permute.xlu0 %1078
      %1080 = vrot.lane.b32.xlu0 %v1054, 95
      %v1081 = vpop.permute.xlu0 %1080
      %1082 = vrot.lane.b32.xlu0 %v1055, 95
      %v1083 = vpop.permute.xlu0 %1082
      %1084 = vrot.lane.b32.xlu0 %v1056, 95
      %v1085 = vpop.permute.xlu0 %1084
      %1086 = vrot.lane.b32.xlu0 %v1057, 95
      %v1087 = vpop.permute.xlu0 %1086
      %1088 = vrot.lane.b32.xlu0 %v1058, 95
      %v1089 = vpop.permute.xlu0 %1088
      %1090 = vrot.lane.b32.xlu0 %v1059, 95
      %v1091 = vpop.permute.xlu0 %1090
      %1092 = vrot.lane.b32.xlu0 %v1060, 95
      %v1093 = vpop.permute.xlu0 %1092
      %1094 = vrot.lane.b32.xlu0 %v1061, 95
      %v1095 = vpop.permute.xlu0 %1094
      %1096 = vrot.lane.b32.xlu0 %v1062, 95
      %v1097 = vpop.permute.xlu0 %1096
      %1098 = vrot.lane.b32.xlu0 %v1063, 95
      %v1099 = vpop.permute.xlu0 %1098
      %vm1100 = vcmask 777216
      %v1101 = vsel %vm1100, %v1077, %v1079
      %v1102 = vsel %vm1100, %v1079, %v1081
      %v1103 = vsel %vm1100, %v1083, %v1085
      %v1104 = vsel %vm1100, %v1085, %v1087
      %v1105 = vsel %vm1100, %v1089, %v1091
      %v1106 = vsel %vm1100, %v1091, %v1093
      %v1107 = vsel %vm1100, %v1095, %v1097
      %v1108 = vsel %vm1100, %v1097, %v1099
      %v1117 = vadd.f32 %v1028, %v1101
      %v1118 = vadd.f32 %v1029, %v1102
      %v1119 = vadd.f32 %v1030, %v1103
      %v1120 = vadd.f32 %v1031, %v1104
      %v1121 = vadd.f32 %v1032, %v1105
      %v1122 = vadd.f32 %v1033, %v1106
      %v1123 = vadd.f32 %v1034, %v1107
      %v1124 = vadd.f32 %v1035, %v1108
      %1125 = vset.pattern.permute.xlu0 17
      %1126 = vperm.xlu0 %1125, %v180
      %v1127 = vpop.permute.xlu0 %1126
      %1129 = vset.pattern.permute.xlu0 17
      %1130 = vperm.xlu0 %1129, %v181
      %v1131 = vpop.permute.xlu0 %1130
      %1133 = vset.pattern.permute.xlu0 17
      %1134 = vperm.xlu0 %1133, %v182
      %v1135 = vpop.permute.xlu0 %1134
      %1137 = vset.pattern.permute.xlu0 17
      %1138 = vperm.xlu0 %1137, %v183
      %v1139 = vpop.permute.xlu0 %1138
      %v1141 = vmul.f32 %v458, %v1127
      %v1142 = vmul.f32 %v459, %v1127
      %v1143 = vmul.f32 %v460, %v1127
      %v1144 = vmul.f32 %v461, %v1131
      %v1145 = vmul.f32 %v462, %v1131
      %v1146 = vmul.f32 %v463, %v1131
      %v1147 = vmul.f32 %v464, %v1135
      %v1148 = vmul.f32 %v465, %v1135
      %v1149 = vmul.f32 %v466, %v1135
      %v1150 = vmul.f32 %v467, %v1139
      %v1151 = vmul.f32 %v468, %v1139
      %v1152 = vmul.f32 %v469, %v1139
      %1165 = vrot.lane.b32.xlu0 %v1141, 94
      %v1166 = vpop.permute.xlu0 %1165
      %1167 = vrot.lane.b32.xlu0 %v1142, 94
      %v1168 = vpop.permute.xlu0 %1167
      %1169 = vrot.lane.b32.xlu0 %v1143, 94
      %v1170 = vpop.permute.xlu0 %1169
      %1171 = vrot.lane.b32.xlu0 %v1144, 94
      %v1172 = vpop.permute.xlu0 %1171
      %1173 = vrot.lane.b32.xlu0 %v1145, 94
      %v1174 = vpop.permute.xlu0 %1173
      %1175 = vrot.lane.b32.xlu0 %v1146, 94
      %v1176 = vpop.permute.xlu0 %1175
      %1177 = vrot.lane.b32.xlu0 %v1147, 94
      %v1178 = vpop.permute.xlu0 %1177
      %1179 = vrot.lane.b32.xlu0 %v1148, 94
      %v1180 = vpop.permute.xlu0 %1179
      %1181 = vrot.lane.b32.xlu0 %v1149, 94
      %v1182 = vpop.permute.xlu0 %1181
      %1183 = vrot.lane.b32.xlu0 %v1150, 94
      %v1184 = vpop.permute.xlu0 %1183
      %1185 = vrot.lane.b32.xlu0 %v1151, 94
      %v1186 = vpop.permute.xlu0 %1185
      %1187 = vrot.lane.b32.xlu0 %v1152, 94
      %v1188 = vpop.permute.xlu0 %1187
      %vm1189 = vcmask 769024
      %v1190 = vsel %vm1189, %v1166, %v1168
      %v1191 = vsel %vm1189, %v1168, %v1170
      %v1192 = vsel %vm1189, %v1172, %v1174
      %v1193 = vsel %vm1189, %v1174, %v1176
      %v1194 = vsel %vm1189, %v1178, %v1180
      %v1195 = vsel %vm1189, %v1180, %v1182
      %v1196 = vsel %vm1189, %v1184, %v1186
      %v1197 = vsel %vm1189, %v1186, %v1188
      %v1206 = vadd.f32 %v1117, %v1190
      %v1207 = vadd.f32 %v1118, %v1191
      %v1208 = vadd.f32 %v1119, %v1192
      %v1209 = vadd.f32 %v1120, %v1193
      %v1210 = vadd.f32 %v1121, %v1194
      %v1211 = vadd.f32 %v1122, %v1195
      %v1212 = vadd.f32 %v1123, %v1196
      %v1213 = vadd.f32 %v1124, %v1197
      %1214 = vset.pattern.permute.xlu0 18
      %1215 = vperm.xlu0 %1214, %v180
      %v1216 = vpop.permute.xlu0 %1215
      %1218 = vset.pattern.permute.xlu0 18
      %1219 = vperm.xlu0 %1218, %v181
      %v1220 = vpop.permute.xlu0 %1219
      %1222 = vset.pattern.permute.xlu0 18
      %1223 = vperm.xlu0 %1222, %v182
      %v1224 = vpop.permute.xlu0 %1223
      %1226 = vset.pattern.permute.xlu0 18
      %1227 = vperm.xlu0 %1226, %v183
      %v1228 = vpop.permute.xlu0 %1227
      %v1230 = vadd.f32 %v1206, %v1216
      %v1231 = vadd.f32 %v1207, %v1216
      %v1232 = vadd.f32 %v1208, %v1220
      %v1233 = vadd.f32 %v1209, %v1220
      %v1234 = vadd.f32 %v1210, %v1224
      %v1235 = vadd.f32 %v1211, %v1224
      %v1236 = vadd.f32 %v1212, %v1228
      %v1237 = vadd.f32 %v1213, %v1228
      %v1238 = vmul.f32 %v1230, %v1230
      %v1239 = vmul.f32 %v1231, %v1231
      %v1240 = vmul.f32 %v1232, %v1232
      %v1241 = vmul.f32 %v1233, %v1233
      %v1242 = vmul.f32 %v1234, %v1234
      %v1243 = vmul.f32 %v1235, %v1235
      %v1244 = vmul.f32 %v1236, %v1236
      %v1245 = vmul.f32 %v1237, %v1237
      %v1246 = vmul.f32 %v1230, %v1238
      %v1247 = vmul.f32 %v1231, %v1239
      %v1248 = vmul.f32 %v1232, %v1240
      %v1249 = vmul.f32 %v1233, %v1241
      %v1250 = vmul.f32 %v1234, %v1242
      %v1251 = vmul.f32 %v1235, %v1243
      %v1252 = vmul.f32 %v1236, %v1244
      %v1253 = vmul.f32 %v1237, %v1245
      %v1254 = vmul.f32 %v1246, 0.044715
      %v1255 = vmul.f32 %v1247, 0.044715
      %v1256 = vmul.f32 %v1248, 0.044715
      %v1257 = vmul.f32 %v1249, 0.044715
      %v1258 = vmul.f32 %v1250, 0.044715
      %v1259 = vmul.f32 %v1251, 0.044715
      %v1260 = vmul.f32 %v1252, 0.044715
      %v1261 = vmul.f32 %v1253, 0.044715
      %v1262 = vadd.f32 %v1230, %v1254
      %v1263 = vadd.f32 %v1231, %v1255
      %v1264 = vadd.f32 %v1232, %v1256
      %v1265 = vadd.f32 %v1233, %v1257
      %v1266 = vadd.f32 %v1234, %v1258
      %v1267 = vadd.f32 %v1235, %v1259
      %v1268 = vadd.f32 %v1236, %v1260
      %v1269 = vadd.f32 %v1237, %v1261
      %v1270 = vmul.f32 %v1262, 0.7978846
      %v1271 = vmul.f32 %v1263, 0.7978846
      %v1272 = vmul.f32 %v1264, 0.7978846
      %v1273 = vmul.f32 %v1265, 0.7978846
      %v1274 = vmul.f32 %v1266, 0.7978846
      %v1275 = vmul.f32 %v1267, 0.7978846
      %v1276 = vmul.f32 %v1268, 0.7978846
      %v1277 = vmul.f32 %v1269, 0.7978846
      %v1278 = vtanh.pop %v1270
      %v1279 = vtanh.pop %v1271
      %v1280 = vtanh.pop %v1272
      %v1281 = vtanh.pop %v1273
      %v1282 = vtanh.pop %v1274
      %v1283 = vtanh.pop %v1275
      %v1284 = vtanh.pop %v1276
      %v1285 = vtanh.pop %v1277
      %v1286 = vadd.f32 %v1278, 1.0
      %v1287 = vadd.f32 %v1279, 1.0
      %v1288 = vadd.f32 %v1280, 1.0
      %v1289 = vadd.f32 %v1281, 1.0
      %v1290 = vadd.f32 %v1282, 1.0
      %v1291 = vadd.f32 %v1283, 1.0
      %v1292 = vadd.f32 %v1284, 1.0
      %v1293 = vadd.f32 %v1285, 1.0
      %v1294 = vmul.f32 %v1286, 0.5
      %v1295 = vmul.f32 %v1287, 0.5
      %v1296 = vmul.f32 %v1288, 0.5
      %v1297 = vmul.f32 %v1289, 0.5
      %v1298 = vmul.f32 %v1290, 0.5
      %v1299 = vmul.f32 %v1291, 0.5
      %v1300 = vmul.f32 %v1292, 0.5
      %v1301 = vmul.f32 %v1293, 0.5
      %v1302 = vmul.f32 %v1230, %v1294
      %v1303 = vmul.f32 %v1231, %v1295
      %v1304 = vmul.f32 %v1232, %v1296
      %v1305 = vmul.f32 %v1233, %v1297
      %v1306 = vmul.f32 %v1234, %v1298
      %v1307 = vmul.f32 %v1235, %v1299
      %v1308 = vmul.f32 %v1236, %v1300
      %v1309 = vmul.f32 %v1237, %v1301
      %v1310 = vadd.f32 %v1302, %v1303
      %1311 = vadd.xlane.f32.xlu0 %v1310
      %v1312 = vpop.xlane.xlu0 %1311
      %v1313 = vadd.f32 %v1304, %v1305
      %1314 = vadd.xlane.f32.xlu0 %v1313
      %v1315 = vpop.xlane.xlu0 %1314
      %v1316 = vadd.f32 %v1306, %v1307
      %1317 = vadd.xlane.f32.xlu0 %v1316
      %v1318 = vpop.xlane.xlu0 %1317
      %v1319 = vadd.f32 %v1308, %v1309
      %1320 = vadd.xlane.f32.xlu0 %v1319
      %v1321 = vpop.xlane.xlu0 %1320
      %v1322 = vrcp.pop 256.0
      %v1323 = vmul.f32 256.0, %v1322
      %v1324 = vsub.f32 1.0, %v1323
      %v1325 = vmul.f32 %v1322, %v1324
      %v1326 = vadd.f32 %v1322, %v1325
      %vm1327 = vweird.f32 %v1322
      %v1328 = vsel %vm1327, %v1322, %v1326
      %v1329 = vmul.f32 %v1312, %v1328
      %v1330 = vmul.f32 %v1315, %v1328
      %v1331 = vmul.f32 %v1318, %v1328
      %v1332 = vmul.f32 %v1321, %v1328
      %v1333 = vmul.f32 %v180, %v1329
      %v1334 = vmul.f32 %v181, %v1330
      %v1335 = vmul.f32 %v182, %v1331
      %v1336 = vmul.f32 %v183, %v1332
      %vm1337 = vcmask 171160
      %v1338 = vsel %vm1337, %v1333, 0.0
      %v1339 = vsel %vm1337, %v1334, 0.0
      %v1340 = vadd.f32 %v1338, %v1339
      %v1341 = vsel %vm1337, %v1335, 0.0
      %v1342 = vadd.f32 %v1340, %v1341
      %v1343 = vsel %vm1337, %v1336, 0.0
      %v1344 = vadd.f32 %v1342, %v1343
      %v1345 = vrot.slane %v1344, 4
      %v1346 = vadd.f32 %v1344, %v1345
      %v1347 = vrot.slane %v1346, 2
      %v1348 = vadd.f32 %v1346, %v1347
      %v1349 = vrot.slane %v1348, 1
      %v1350 = vadd.f32 %v1348, %v1349
      %v1351 = vmul.f32 %v1350, %v1350
      %v1352 = vmul.f32 %v1350, %v1351
      %v1353 = vmul.f32 %v1352, 0.044715
      %v1354 = vadd.f32 %v1350, %v1353
      %v1355 = vmul.f32 %v1354, 0.7978846
      %v1356 = vtanh.pop %v1355
      %v1357 = vadd.f32 %v1356, 1.0
      %v1358 = vmul.f32 %v1357, 0.5
      %v1359 = vmul.f32 %v1350, %v1358
      %1361 = vrot.lane.b32.xlu0 %v1359, 2
      %v1362 = vpop.permute.xlu0 %1361
      %v1364 = vmul.f32 %v180, %v1362
      %v1365 = vmul.f32 %v181, %v1362
      %v1366 = vmul.f32 %v182, %v1362
      %v1367 = vmul.f32 %v183, %v1362
      %1372 = vrot.lane.b32.xlu0 %v1364, 107
      %v1373 = vpop.permute.xlu0 %1372
      %1374 = vrot.lane.b32.xlu0 %v1365, 107
      %v1375 = vpop.permute.xlu0 %1374
      %1376 = vrot.lane.b32.xlu0 %v1366, 107
      %v1377 = vpop.permute.xlu0 %1376
      %1378 = vrot.lane.b32.xlu0 %v1367, 107
      %v1379 = vpop.permute.xlu0 %1378
      %vm1384 = vcmask 15360
      %v1385 = vsel %vm1384, %v1373, 0.0
      %1386 = vadd.xlane.f32.xlu0 %v1385
      %v1387 = vpop.xlane.xlu0 %1386
      %v1388 = vsel %vm1384, %v1375, 0.0
      %1389 = vadd.xlane.f32.xlu0 %v1388
      %v1390 = vpop.xlane.xlu0 %1389
      %v1391 = vsel %vm1384, %v1377, 0.0
      %1392 = vadd.xlane.f32.xlu0 %v1391
      %v1393 = vpop.xlane.xlu0 %1392
      %v1394 = vsel %vm1384, %v1379, 0.0
      %1395 = vadd.xlane.f32.xlu0 %v1394
      %v1396 = vpop.xlane.xlu0 %1395
      %v1397 = vxor.u32 %v1387, 2147483648
      %v1398 = vxor.u32 %v1390, 2147483648
      %v1399 = vxor.u32 %v1393, 2147483648
      %v1400 = vxor.u32 %v1396, 2147483648
      %v1401 = vmul.f32 %v1397, 1.442695
      %v1402 = vpow.pop %v1401
      %v1403 = vmul.f32 %v1398, 1.442695
      %v1404 = vpow.pop %v1403
      %v1405 = vmul.f32 %v1399, 1.442695
      %v1406 = vpow.pop %v1405
      %v1407 = vmul.f32 %v1400, 1.442695
      %v1408 = vpow.pop %v1407
      %v1409 = vadd.f32 %v1402, 1.0
      %v1410 = vadd.f32 %v1404, 1.0
      %v1411 = vadd.f32 %v1406, 1.0
      %v1412 = vadd.f32 %v1408, 1.0
      %v1413 = vrcp.pop %v1409
      %v1414 = vmul.f32 %v1409, %v1413
      %v1415 = vsub.f32 1.0, %v1414
      %v1416 = vmul.f32 %v1413, %v1415
      %v1417 = vadd.f32 %v1413, %v1416
      %vm1418 = vweird.f32 %v1409
      %vm1419 = vweird.f32 %v1413
      %vm1420 = vmor %vm1418, %vm1419
      %v1421 = vsel %vm1420, %v1413, %v1417
      %v1422 = vand.u32 2147483647, %v1409
      %vm1423 = vcmp.eq.f32.partialorder %v1422, 8.507059e+37
      %v1424 = vand.u32 %v1409, 2147483648
      %v1425 = vor.u32 1.1754944e-38, %v1424
      %v1426 = vsel %vm1423, %v1425, %v1421
      %v1427 = vmul.f32 1.0, %v1426
      %v1428 = vrcp.pop %v1410
      %v1429 = vmul.f32 %v1410, %v1428
      %v1430 = vsub.f32 1.0, %v1429
      %v1431 = vmul.f32 %v1428, %v1430
      %v1432 = vadd.f32 %v1428, %v1431
      %vm1433 = vweird.f32 %v1410
      %vm1434 = vweird.f32 %v1428
      %vm1435 = vmor %vm1433, %vm1434
      %v1436 = vsel %vm1435, %v1428, %v1432
      %v1437 = vand.u32 2147483647, %v1410
      %vm1438 = vcmp.eq.f32.partialorder %v1437, 8.507059e+37
      %v1439 = vand.u32 %v1410, 2147483648
      %v1440 = vor.u32 1.1754944e-38, %v1439
      %v1441 = vsel %vm1438, %v1440, %v1436
      %v1442 = vmul.f32 1.0, %v1441
      %v1443 = vrcp.pop %v1411
      %v1444 = vmul.f32 %v1411, %v1443
      %v1445 = vsub.f32 1.0, %v1444
      %v1446 = vmul.f32 %v1443, %v1445
      %v1447 = vadd.f32 %v1443, %v1446
      %vm1448 = vweird.f32 %v1411
      %vm1449 = vweird.f32 %v1443
      %vm1450 = vmor %vm1448, %vm1449
      %v1451 = vsel %vm1450, %v1443, %v1447
      %v1452 = vand.u32 2147483647, %v1411
      %vm1453 = vcmp.eq.f32.partialorder %v1452, 8.507059e+37
      %v1454 = vand.u32 %v1411, 2147483648
      %v1455 = vor.u32 1.1754944e-38, %v1454
      %v1456 = vsel %vm1453, %v1455, %v1451
      %v1457 = vmul.f32 1.0, %v1456
      %v1458 = vrcp.pop %v1412
      %v1459 = vmul.f32 %v1412, %v1458
      %v1460 = vsub.f32 1.0, %v1459
      %v1461 = vmul.f32 %v1458, %v1460
      %v1462 = vadd.f32 %v1458, %v1461
      %vm1463 = vweird.f32 %v1412
      %vm1464 = vweird.f32 %v1458
      %vm1465 = vmor %vm1463, %vm1464
      %v1466 = vsel %vm1465, %v1458, %v1462
      %v1467 = vand.u32 2147483647, %v1412
      %vm1468 = vcmp.eq.f32.partialorder %v1467, 8.507059e+37
      %v1469 = vand.u32 %v1412, 2147483648
      %v1470 = vor.u32 1.1754944e-38, %v1469
      %v1471 = vsel %vm1468, %v1470, %v1466
      %v1472 = vmul.f32 1.0, %v1471
      %v1473 = vmul.f32 %v1302, %v1427
      %v1474 = vmul.f32 %v1303, %v1427
      %v1475 = vmul.f32 %v1304, %v1442
      %v1476 = vmul.f32 %v1305, %v1442
      %v1477 = vmul.f32 %v1306, %v1457
      %v1478 = vmul.f32 %v1307, %v1457
      %v1479 = vmul.f32 %v1308, %v1472
      %v1480 = vmul.f32 %v1309, %v1472
      %v1481 = vpack.c.bf16 %v1475, %v1473
      %v1482 = vpack.c.bf16 %v1476, %v1474
      %v1483 = vpack.c.bf16 %v1479, %v1477
      %v1484 = vpack.c.bf16 %v1480, %v1478
      %1486 = vset.pattern.permute.xlu0 32
      %1487 = vperm.xlu0 %1486, %v184
      %v1488 = vpop.permute.xlu0 %1487
      %vm1490 = vcmask 261120
      %v1492 = vsel %vm1490, %v187, 0
      %1494 = vmatpush.bf16.msra.mxu0 0
      %1495 = vmatpush.bf16.msra.mxu0 0
      %1496 = vmatpush.bf16.msra.mxu0 0
      %1497 = vmatpush.bf16.msra.mxu0 0
      %1498 = vmatpush.bf16.msra.mxu0 0
      %1499 = vmatpush.bf16.msra.mxu0 0
      %1500 = vmatpush.bf16.msra.mxu0 %v1483
      %1501 = vmatpush.bf16.msra.mxu0 %v1481
      %1502 = vmatmul.bf16.gmra.mxu0 %v1492
      %v1503 = vpop.f32.mrf.mxu0
      %v1504 = vadd.f32 %v1488, %v1503
      %v1505 = vpop.f32.mrf.mxu0
      %1506 = vdwg.mxu0
      %1507 = vmatpush.bf16.msra.mxu0 0
      %1508 = vmatpush.bf16.msra.mxu0 0
      %1509 = vmatpush.bf16.msra.mxu0 0
      %1510 = vmatpush.bf16.msra.mxu0 0
      %1511 = vmatpush.bf16.msra.mxu0 0
      %1512 = vmatpush.bf16.msra.mxu0 0
      %1513 = vmatpush.bf16.msra.mxu0 %v1484
      %1514 = vmatpush.bf16.msra.mxu0 %v1482
      %1515 = vmatmul.bf16.gmra.mxu0 %v1492
      %v1516 = vpop.f32.mrf.mxu0
      %v1517 = vadd.f32 %v1488, %v1516
      %v1518 = vpop.f32.mrf.mxu0
      %1519 = vdwg.mxu0
      %v1520 = vadd.f32 %v231, %v1504
      %v1521 = vadd.f32 %v232, %v1517
      %1522 = vst [vmem:[%s177] sm:$0xff] %v1520
      %1523 = vst [vmem:[%s177 + $0x8] sm:$0xff] %v1521
      %s1524 = scalar_lea.vmem %s170, 16
      %v1525 = vld [vmem:[%s1524] sm:$0xff]
      %v1526 = vld [vmem:[%s1524 + $0x8] sm:$0xff]
      %v1527 = vpack.c.bf16 %v1525, %v1525
      %v1528 = vpack.c.bf16 %v1526, %v1526
      %v1530 = vsel %vm262, %v1527, 0
      %v1533 = vsel %vm262, %v1528, 0
      %1535 = vmatpush.bf16.msra.mxu0 0
      %1536 = vmatpush.bf16.msra.mxu0 0
      %1537 = vmatpush.bf16.msra.mxu0 0
      %1538 = vmatpush.bf16.msra.mxu0 0
      %1539 = vmatpush.bf16.msra.mxu0 0
      %1540 = vmatpush.bf16.msra.mxu0 0
      %1541 = vmatpush.bf16.msra.mxu0 0
      %1542 = vmatpush.bf16.msra.mxu0 %v1530
      %1543 = vmatmul.bf16.gmra.mxu0 %v257
      %v1544 = vpop.f32.mrf.mxu0
      %v1545 = vadd.f32 %v238, %v1544
      %v1546 = vpop.f32.mrf.mxu0
      %v1547 = vadd.f32 %v243, %v1546
      %1548 = vmatmul.bf16.gmra.mxu0 %v260
      %v1549 = vpop.f32.mrf.mxu0
      %v1550 = vadd.f32 %v248, %v1549
      %v1551 = vpop.f32.mrf.mxu0
      %v1552 = vadd.f32 %v253, %v1551
      %1553 = vdwg.mxu0
      %1554 = vmatpush.bf16.msra.mxu0 0
      %1555 = vmatpush.bf16.msra.mxu0 0
      %1556 = vmatpush.bf16.msra.mxu0 0
      %1557 = vmatpush.bf16.msra.mxu0 0
      %1558 = vmatpush.bf16.msra.mxu0 0
      %1559 = vmatpush.bf16.msra.mxu0 0
      %1560 = vmatpush.bf16.msra.mxu0 0
      %1561 = vmatpush.bf16.msra.mxu0 %v1533
      %1562 = vmatmul.bf16.gmra.mxu0 %v257
      %v1563 = vpop.f32.mrf.mxu0
      %v1564 = vadd.f32 %v238, %v1563
      %v1565 = vpop.f32.mrf.mxu0
      %v1566 = vadd.f32 %v243, %v1565
      %1567 = vmatmul.bf16.gmra.mxu0 %v260
      %v1568 = vpop.f32.mrf.mxu0
      %v1569 = vadd.f32 %v248, %v1568
      %v1570 = vpop.f32.mrf.mxu0
      %v1571 = vadd.f32 %v253, %v1570
      %1572 = vdwg.mxu0
      %v1573 = vmul.f32 %v1545, %v1545
      %v1574 = vmul.f32 %v1564, %v1564
      %v1575 = vmul.f32 %v1547, %v1547
      %v1576 = vmul.f32 %v1566, %v1566
      %v1577 = vmul.f32 %v1550, %v1550
      %v1578 = vmul.f32 %v1569, %v1569
      %v1579 = vmul.f32 %v1552, %v1552
      %v1580 = vmul.f32 %v1571, %v1571
      %v1581 = vmul.f32 %v1545, %v1573
      %v1582 = vmul.f32 %v1564, %v1574
      %v1583 = vmul.f32 %v1547, %v1575
      %v1584 = vmul.f32 %v1566, %v1576
      %v1585 = vmul.f32 %v1550, %v1577
      %v1586 = vmul.f32 %v1569, %v1578
      %v1587 = vmul.f32 %v1552, %v1579
      %v1588 = vmul.f32 %v1571, %v1580
      %v1589 = vmul.f32 %v1581, 0.044715
      %v1590 = vmul.f32 %v1582, 0.044715
      %v1591 = vmul.f32 %v1583, 0.044715
      %v1592 = vmul.f32 %v1584, 0.044715
      %v1593 = vmul.f32 %v1585, 0.044715
      %v1594 = vmul.f32 %v1586, 0.044715
      %v1595 = vmul.f32 %v1587, 0.044715
      %v1596 = vmul.f32 %v1588, 0.044715
      %v1597 = vadd.f32 %v1545, %v1589
      %v1598 = vadd.f32 %v1564, %v1590
      %v1599 = vadd.f32 %v1547, %v1591
      %v1600 = vadd.f32 %v1566, %v1592
      %v1601 = vadd.f32 %v1550, %v1593
      %v1602 = vadd.f32 %v1569, %v1594
      %v1603 = vadd.f32 %v1552, %v1595
      %v1604 = vadd.f32 %v1571, %v1596
      %v1605 = vmul.f32 %v1597, 0.7978846
      %v1606 = vmul.f32 %v1598, 0.7978846
      %v1607 = vmul.f32 %v1599, 0.7978846
      %v1608 = vmul.f32 %v1600, 0.7978846
      %v1609 = vmul.f32 %v1601, 0.7978846
      %v1610 = vmul.f32 %v1602, 0.7978846
      %v1611 = vmul.f32 %v1603, 0.7978846
      %v1612 = vmul.f32 %v1604, 0.7978846
      %v1613 = vtanh.pop %v1605
      %v1614 = vtanh.pop %v1606
      %v1615 = vtanh.pop %v1607
      %v1616 = vtanh.pop %v1608
      %v1617 = vtanh.pop %v1609
      %v1618 = vtanh.pop %v1610
      %v1619 = vtanh.pop %v1611
      %v1620 = vtanh.pop %v1612
      %v1621 = vadd.f32 %v1613, 1.0
      %v1622 = vadd.f32 %v1614, 1.0
      %v1623 = vadd.f32 %v1615, 1.0
      %v1624 = vadd.f32 %v1616, 1.0
      %v1625 = vadd.f32 %v1617, 1.0
      %v1626 = vadd.f32 %v1618, 1.0
      %v1627 = vadd.f32 %v1619, 1.0
      %v1628 = vadd.f32 %v1620, 1.0
      %v1629 = vmul.f32 %v1621, 0.5
      %v1630 = vmul.f32 %v1622, 0.5
      %v1631 = vmul.f32 %v1623, 0.5
      %v1632 = vmul.f32 %v1624, 0.5
      %v1633 = vmul.f32 %v1625, 0.5
      %v1634 = vmul.f32 %v1626, 0.5
      %v1635 = vmul.f32 %v1627, 0.5
      %v1636 = vmul.f32 %v1628, 0.5
      %v1637 = vmul.f32 %v1545, %v1629
      %v1638 = vmul.f32 %v1564, %v1630
      %v1639 = vmul.f32 %v1547, %v1631
      %v1640 = vmul.f32 %v1566, %v1632
      %v1641 = vmul.f32 %v1550, %v1633
      %v1642 = vmul.f32 %v1569, %v1634
      %v1643 = vmul.f32 %v1552, %v1635
      %v1644 = vmul.f32 %v1571, %v1636
      %1653 = vrot.lane.b32.xlu0 %v1637, 17
      %v1654 = vpop.permute.xlu0 %1653
      %1655 = vrot.lane.b32.xlu0 %v1638, 17
      %v1656 = vpop.permute.xlu0 %1655
      %1657 = vrot.lane.b32.xlu0 %v1639, 17
      %v1658 = vpop.permute.xlu0 %1657
      %1659 = vrot.lane.b32.xlu0 %v1640, 17
      %v1660 = vpop.permute.xlu0 %1659
      %1661 = vrot.lane.b32.xlu0 %v1641, 17
      %v1662 = vpop.permute.xlu0 %1661
      %1663 = vrot.lane.b32.xlu0 %v1642, 17
      %v1664 = vpop.permute.xlu0 %1663
      %1665 = vrot.lane.b32.xlu0 %v1643, 17
      %v1666 = vpop.permute.xlu0 %1665
      %1667 = vrot.lane.b32.xlu0 %v1644, 17
      %v1668 = vpop.permute.xlu0 %1667
      %v1669 = vsel %vm403, %v1654, %v1656
      %v1670 = vsel %vm403, %v1658, %v1660
      %v1671 = vsel %vm403, %v1662, %v1664
      %v1672 = vsel %vm403, %v1666, %v1668
      %v1685 = vsel %vm403, 0.0, %v1654
      %v1686 = vsel %vm403, 0.0, %v1658
      %v1687 = vsel %vm403, 0.0, %v1662
      %v1688 = vsel %vm403, 0.0, %v1666
      %v1689 = vsel %vm403, %v1656, 0.0
      %v1690 = vsel %vm403, %v1660, 0.0
      %v1691 = vsel %vm403, %v1664, 0.0
      %v1692 = vsel %vm403, %v1668, 0.0
      %v1693 = vsel %vm434, %v1685, 0.0
      %v1694 = vsel %vm435, %v1669, 0.0
      %v1695 = vsel %vm436, %v1689, 0.0
      %v1696 = vsel %vm434, %v1686, 0.0
      %v1697 = vsel %vm435, %v1670, 0.0
      %v1698 = vsel %vm436, %v1690, 0.0
      %v1699 = vsel %vm434, %v1687, 0.0
      %v1700 = vsel %vm435, %v1671, 0.0
      %v1701 = vsel %vm436, %v1691, 0.0
      %v1702 = vsel %vm434, %v1688, 0.0
      %v1703 = vsel %vm435, %v1672, 0.0
      %v1704 = vsel %vm436, %v1692, 0.0
      %v1705 = vsel %vm455, %v1685, 0.0
      %v1706 = vsel %vm456, %v1669, 0.0
      %v1707 = vsel %vm457, %v1689, 0.0
      %v1708 = vsel %vm455, %v1686, 0.0
      %v1709 = vsel %vm456, %v1670, 0.0
      %v1710 = vsel %vm457, %v1690, 0.0
      %v1711 = vsel %vm455, %v1687, 0.0
      %v1712 = vsel %vm456, %v1671, 0.0
      %v1713 = vsel %vm457, %v1691, 0.0
      %v1714 = vsel %vm455, %v1688, 0.0
      %v1715 = vsel %vm456, %v1672, 0.0
      %v1716 = vsel %vm457, %v1692, 0.0
      %v1717 = vmul.f32 %v1693, %v472
      %v1718 = vmul.f32 %v1694, %v472
      %v1719 = vmul.f32 %v1696, %v476
      %v1720 = vmul.f32 %v1697, %v476
      %v1721 = vmul.f32 %v1699, %v480
      %v1722 = vmul.f32 %v1700, %v480
      %v1723 = vmul.f32 %v1702, %v484
      %v1724 = vmul.f32 %v1703, %v484
      %v1725 = vadd.f32 %v1717, 0.0
      %v1726 = vadd.f32 %v1718, 0.0
      %v1727 = vadd.f32 %v1719, 0.0
      %v1728 = vadd.f32 %v1720, 0.0
      %v1729 = vadd.f32 %v1721, 0.0
      %v1730 = vadd.f32 %v1722, 0.0
      %v1731 = vadd.f32 %v1723, 0.0
      %v1732 = vadd.f32 %v1724, 0.0
      %v1733 = vmul.f32 %v1685, %v504
      %v1734 = vmul.f32 %v1669, %v504
      %v1735 = vmul.f32 %v1689, %v504
      %v1736 = vmul.f32 %v1686, %v508
      %v1737 = vmul.f32 %v1670, %v508
      %v1738 = vmul.f32 %v1690, %v508
      %v1739 = vmul.f32 %v1687, %v512
      %v1740 = vmul.f32 %v1671, %v512
      %v1741 = vmul.f32 %v1691, %v512
      %v1742 = vmul.f32 %v1688, %v516
      %v1743 = vmul.f32 %v1672, %v516
      %v1744 = vmul.f32 %v1692, %v516
      %1757 = vrot.lane.b32.xlu0 %v1733, 127
      %v1758 = vpop.permute.xlu0 %1757
      %1759 = vrot.lane.b32.xlu0 %v1734, 127
      %v1760 = vpop.permute.xlu0 %1759
      %1761 = vrot.lane.b32.xlu0 %v1735, 127
      %v1762 = vpop.permute.xlu0 %1761
      %1763 = vrot.lane.b32.xlu0 %v1736, 127
      %v1764 = vpop.permute.xlu0 %1763
      %1765 = vrot.lane.b32.xlu0 %v1737, 127
      %v1766 = vpop.permute.xlu0 %1765
      %1767 = vrot.lane.b32.xlu0 %v1738, 127
      %v1768 = vpop.permute.xlu0 %1767
      %1769 = vrot.lane.b32.xlu0 %v1739, 127
      %v1770 = vpop.permute.xlu0 %1769
      %1771 = vrot.lane.b32.xlu0 %v1740, 127
      %v1772 = vpop.permute.xlu0 %1771
      %1773 = vrot.lane.b32.xlu0 %v1741, 127
      %v1774 = vpop.permute.xlu0 %1773
      %1775 = vrot.lane.b32.xlu0 %v1742, 127
      %v1776 = vpop.permute.xlu0 %1775
      %1777 = vrot.lane.b32.xlu0 %v1743, 127
      %v1778 = vpop.permute.xlu0 %1777
      %1779 = vrot.lane.b32.xlu0 %v1744, 127
      %v1780 = vpop.permute.xlu0 %1779
      %v1781 = vsel %vm566, %v1758, %v1760
      %v1782 = vsel %vm566, %v1760, %v1762
      %v1783 = vsel %vm566, %v1764, %v1766
      %v1784 = vsel %vm566, %v1766, %v1768
      %v1785 = vsel %vm566, %v1770, %v1772
      %v1786 = vsel %vm566, %v1772, %v1774
      %v1787 = vsel %vm566, %v1776, %v1778
      %v1788 = vsel %vm566, %v1778, %v1780
      %v1797 = vadd.f32 %v1725, %v1781
      %v1798 = vadd.f32 %v1726, %v1782
      %v1799 = vadd.f32 %v1727, %v1783
      %v1800 = vadd.f32 %v1728, %v1784
      %v1801 = vadd.f32 %v1729, %v1785
      %v1802 = vadd.f32 %v1730, %v1786
      %v1803 = vadd.f32 %v1731, %v1787
      %v1804 = vadd.f32 %v1732, %v1788
      %v1805 = vmul.f32 %v1705, %v593
      %v1806 = vmul.f32 %v1706, %v593
      %v1807 = vmul.f32 %v1707, %v593
      %v1808 = vmul.f32 %v1708, %v597
      %v1809 = vmul.f32 %v1709, %v597
      %v1810 = vmul.f32 %v1710, %v597
      %v1811 = vmul.f32 %v1711, %v601
      %v1812 = vmul.f32 %v1712, %v601
      %v1813 = vmul.f32 %v1713, %v601
      %v1814 = vmul.f32 %v1714, %v605
      %v1815 = vmul.f32 %v1715, %v605
      %v1816 = vmul.f32 %v1716, %v605
      %1829 = vrot.lane.b32.xlu0 %v1805, 126
      %v1830 = vpop.permute.xlu0 %1829
      %1831 = vrot.lane.b32.xlu0 %v1806, 126
      %v1832 = vpop.permute.xlu0 %1831
      %1833 = vrot.lane.b32.xlu0 %v1807, 126
      %v1834 = vpop.permute.xlu0 %1833
      %1835 = vrot.lane.b32.xlu0 %v1808, 126
      %v1836 = vpop.permute.xlu0 %1835
      %1837 = vrot.lane.b32.xlu0 %v1809, 126
      %v1838 = vpop.permute.xlu0 %1837
      %1839 = vrot.lane.b32.xlu0 %v1810, 126
      %v1840 = vpop.permute.xlu0 %1839
      %1841 = vrot.lane.b32.xlu0 %v1811, 126
      %v1842 = vpop.permute.xlu0 %1841
      %1843 = vrot.lane.b32.xlu0 %v1812, 126
      %v1844 = vpop.permute.xlu0 %1843
      %1845 = vrot.lane.b32.xlu0 %v1813, 126
      %v1846 = vpop.permute.xlu0 %1845
      %1847 = vrot.lane.b32.xlu0 %v1814, 126
      %v1848 = vpop.permute.xlu0 %1847
      %1849 = vrot.lane.b32.xlu0 %v1815, 126
      %v1850 = vpop.permute.xlu0 %1849
      %1851 = vrot.lane.b32.xlu0 %v1816, 126
      %v1852 = vpop.permute.xlu0 %1851
      %v1853 = vsel %vm655, %v1830, %v1832
      %v1854 = vsel %vm655, %v1832, %v1834
      %v1855 = vsel %vm655, %v1836, %v1838
      %v1856 = vsel %vm655, %v1838, %v1840
      %v1857 = vsel %vm655, %v1842, %v1844
      %v1858 = vsel %vm655, %v1844, %v1846
      %v1859 = vsel %vm655, %v1848, %v1850
      %v1860 = vsel %vm655, %v1850, %v1852
      %v1869 = vadd.f32 %v1797, %v1853
      %v1870 = vadd.f32 %v1798, %v1854
      %v1871 = vadd.f32 %v1799, %v1855
      %v1872 = vadd.f32 %v1800, %v1856
      %v1873 = vadd.f32 %v1801, %v1857
      %v1874 = vadd.f32 %v1802, %v1858
      %v1875 = vadd.f32 %v1803, %v1859
      %v1876 = vadd.f32 %v1804, %v1860
      %v1877 = vmul.f32 %v1693, %v682
      %v1878 = vmul.f32 %v1694, %v682
      %v1879 = vmul.f32 %v1695, %v682
      %v1880 = vmul.f32 %v1696, %v686
      %v1881 = vmul.f32 %v1697, %v686
      %v1882 = vmul.f32 %v1698, %v686
      %v1883 = vmul.f32 %v1699, %v690
      %v1884 = vmul.f32 %v1700, %v690
      %v1885 = vmul.f32 %v1701, %v690
      %v1886 = vmul.f32 %v1702, %v694
      %v1887 = vmul.f32 %v1703, %v694
      %v1888 = vmul.f32 %v1704, %v694
      %1901 = vrot.lane.b32.xlu0 %v1877, 112
      %v1902 = vpop.permute.xlu0 %1901
      %1903 = vrot.lane.b32.xlu0 %v1878, 112
      %v1904 = vpop.permute.xlu0 %1903
      %1905 = vrot.lane.b32.xlu0 %v1879, 112
      %v1906 = vpop.permute.xlu0 %1905
      %1907 = vrot.lane.b32.xlu0 %v1880, 112
      %v1908 = vpop.permute.xlu0 %1907
      %1909 = vrot.lane.b32.xlu0 %v1881, 112
      %v1910 = vpop.permute.xlu0 %1909
      %1911 = vrot.lane.b32.xlu0 %v1882, 112
      %v1912 = vpop.permute.xlu0 %1911
      %1913 = vrot.lane.b32.xlu0 %v1883, 112
      %v1914 = vpop.permute.xlu0 %1913
      %1915 = vrot.lane.b32.xlu0 %v1884, 112
      %v1916 = vpop.permute.xlu0 %1915
      %1917 = vrot.lane.b32.xlu0 %v1885, 112
      %v1918 = vpop.permute.xlu0 %1917
      %1919 = vrot.lane.b32.xlu0 %v1886, 112
      %v1920 = vpop.permute.xlu0 %1919
      %1921 = vrot.lane.b32.xlu0 %v1887, 112
      %v1922 = vpop.permute.xlu0 %1921
      %1923 = vrot.lane.b32.xlu0 %v1888, 112
      %v1924 = vpop.permute.xlu0 %1923
      %v1925 = vsel %vm744, %v1902, %v1904
      %v1926 = vsel %vm744, %v1904, %v1906
      %v1927 = vsel %vm744, %v1908, %v1910
      %v1928 = vsel %vm744, %v1910, %v1912
      %v1929 = vsel %vm744, %v1914, %v1916
      %v1930 = vsel %vm744, %v1916, %v1918
      %v1931 = vsel %vm744, %v1920, %v1922
      %v1932 = vsel %vm744, %v1922, %v1924
      %v1941 = vadd.f32 %v1869, %v1925
      %v1942 = vadd.f32 %v1870, %v1926
      %v1943 = vadd.f32 %v1871, %v1927
      %v1944 = vadd.f32 %v1872, %v1928
      %v1945 = vadd.f32 %v1873, %v1929
      %v1946 = vadd.f32 %v1874, %v1930
      %v1947 = vadd.f32 %v1875, %v1931
      %v1948 = vadd.f32 %v1876, %v1932
      %v1949 = vmul.f32 %v1685, %v771
      %v1950 = vmul.f32 %v1669, %v771
      %v1951 = vmul.f32 %v1689, %v771
      %v1952 = vmul.f32 %v1686, %v775
      %v1953 = vmul.f32 %v1670, %v775
      %v1954 = vmul.f32 %v1690, %v775
      %v1955 = vmul.f32 %v1687, %v779
      %v1956 = vmul.f32 %v1671, %v779
      %v1957 = vmul.f32 %v1691, %v779
      %v1958 = vmul.f32 %v1688, %v783
      %v1959 = vmul.f32 %v1672, %v783
      %v1960 = vmul.f32 %v1692, %v783
      %1973 = vrot.lane.b32.xlu0 %v1949, 111
      %v1974 = vpop.permute.xlu0 %1973
      %1975 = vrot.lane.b32.xlu0 %v1950, 111
      %v1976 = vpop.permute.xlu0 %1975
      %1977 = vrot.lane.b32.xlu0 %v1951, 111
      %v1978 = vpop.permute.xlu0 %1977
      %1979 = vrot.lane.b32.xlu0 %v1952, 111
      %v1980 = vpop.permute.xlu0 %1979
      %1981 = vrot.lane.b32.xlu0 %v1953, 111
      %v1982 = vpop.permute.xlu0 %1981
      %1983 = vrot.lane.b32.xlu0 %v1954, 111
      %v1984 = vpop.permute.xlu0 %1983
      %1985 = vrot.lane.b32.xlu0 %v1955, 111
      %v1986 = vpop.permute.xlu0 %1985
      %1987 = vrot.lane.b32.xlu0 %v1956, 111
      %v1988 = vpop.permute.xlu0 %1987
      %1989 = vrot.lane.b32.xlu0 %v1957, 111
      %v1990 = vpop.permute.xlu0 %1989
      %1991 = vrot.lane.b32.xlu0 %v1958, 111
      %v1992 = vpop.permute.xlu0 %1991
      %1993 = vrot.lane.b32.xlu0 %v1959, 111
      %v1994 = vpop.permute.xlu0 %1993
      %1995 = vrot.lane.b32.xlu0 %v1960, 111
      %v1996 = vpop.permute.xlu0 %1995
      %v1997 = vsel %vm833, %v1974, %v1976
      %v1998 = vsel %vm833, %v1976, %v1978
      %v1999 = vsel %vm833, %v1980, %v1982
      %v2000 = vsel %vm833, %v1982, %v1984
      %v2001 = vsel %vm833, %v1986, %v1988
      %v2002 = vsel %vm833, %v1988, %v1990
      %v2003 = vsel %vm833, %v1992, %v1994
      %v2004 = vsel %vm833, %v1994, %v1996
      %v2013 = vadd.f32 %v1941, %v1997
      %v2014 = vadd.f32 %v1942, %v1998
      %v2015 = vadd.f32 %v1943, %v1999
      %v2016 = vadd.f32 %v1944, %v2000
      %v2017 = vadd.f32 %v1945, %v2001
      %v2018 = vadd.f32 %v1946, %v2002
      %v2019 = vadd.f32 %v1947, %v2003
      %v2020 = vadd.f32 %v1948, %v2004
      %v2021 = vmul.f32 %v1705, %v860
      %v2022 = vmul.f32 %v1706, %v860
      %v2023 = vmul.f32 %v1707, %v860
      %v2024 = vmul.f32 %v1708, %v864
      %v2025 = vmul.f32 %v1709, %v864
      %v2026 = vmul.f32 %v1710, %v864
      %v2027 = vmul.f32 %v1711, %v868
      %v2028 = vmul.f32 %v1712, %v868
      %v2029 = vmul.f32 %v1713, %v868
      %v2030 = vmul.f32 %v1714, %v872
      %v2031 = vmul.f32 %v1715, %v872
      %v2032 = vmul.f32 %v1716, %v872
      %2045 = vrot.lane.b32.xlu0 %v2021, 110
      %v2046 = vpop.permute.xlu0 %2045
      %2047 = vrot.lane.b32.xlu0 %v2022, 110
      %v2048 = vpop.permute.xlu0 %2047
      %2049 = vrot.lane.b32.xlu0 %v2023, 110
      %v2050 = vpop.permute.xlu0 %2049
      %2051 = vrot.lane.b32.xlu0 %v2024, 110
      %v2052 = vpop.permute.xlu0 %2051
      %2053 = vrot.lane.b32.xlu0 %v2025, 110
      %v2054 = vpop.permute.xlu0 %2053
      %2055 = vrot.lane.b32.xlu0 %v2026, 110
      %v2056 = vpop.permute.xlu0 %2055
      %2057 = vrot.lane.b32.xlu0 %v2027, 110
      %v2058 = vpop.permute.xlu0 %2057
      %2059 = vrot.lane.b32.xlu0 %v2028, 110
      %v2060 = vpop.permute.xlu0 %2059
      %2061 = vrot.lane.b32.xlu0 %v2029, 110
      %v2062 = vpop.permute.xlu0 %2061
      %2063 = vrot.lane.b32.xlu0 %v2030, 110
      %v2064 = vpop.permute.xlu0 %2063
      %2065 = vrot.lane.b32.xlu0 %v2031, 110
      %v2066 = vpop.permute.xlu0 %2065
      %2067 = vrot.lane.b32.xlu0 %v2032, 110
      %v2068 = vpop.permute.xlu0 %2067
      %v2069 = vsel %vm922, %v2046, %v2048
      %v2070 = vsel %vm922, %v2048, %v2050
      %v2071 = vsel %vm922, %v2052, %v2054
      %v2072 = vsel %vm922, %v2054, %v2056
      %v2073 = vsel %vm922, %v2058, %v2060
      %v2074 = vsel %vm922, %v2060, %v2062
      %v2075 = vsel %vm922, %v2064, %v2066
      %v2076 = vsel %vm922, %v2066, %v2068
      %v2085 = vadd.f32 %v2013, %v2069
      %v2086 = vadd.f32 %v2014, %v2070
      %v2087 = vadd.f32 %v2015, %v2071
      %v2088 = vadd.f32 %v2016, %v2072
      %v2089 = vadd.f32 %v2017, %v2073
      %v2090 = vadd.f32 %v2018, %v2074
      %v2091 = vadd.f32 %v2019, %v2075
      %v2092 = vadd.f32 %v2020, %v2076
      %v2093 = vmul.f32 %v1693, %v949
      %v2094 = vmul.f32 %v1694, %v949
      %v2095 = vmul.f32 %v1695, %v949
      %v2096 = vmul.f32 %v1696, %v953
      %v2097 = vmul.f32 %v1697, %v953
      %v2098 = vmul.f32 %v1698, %v953
      %v2099 = vmul.f32 %v1699, %v957
      %v2100 = vmul.f32 %v1700, %v957
      %v2101 = vmul.f32 %v1701, %v957
      %v2102 = vmul.f32 %v1702, %v961
      %v2103 = vmul.f32 %v1703, %v961
      %v2104 = vmul.f32 %v1704, %v961
      %2117 = vrot.lane.b32.xlu0 %v2093, 96
      %v2118 = vpop.permute.xlu0 %2117
      %2119 = vrot.lane.b32.xlu0 %v2094, 96
      %v2120 = vpop.permute.xlu0 %2119
      %2121 = vrot.lane.b32.xlu0 %v2095, 96
      %v2122 = vpop.permute.xlu0 %2121
      %2123 = vrot.lane.b32.xlu0 %v2096, 96
      %v2124 = vpop.permute.xlu0 %2123
      %2125 = vrot.lane.b32.xlu0 %v2097, 96
      %v2126 = vpop.permute.xlu0 %2125
      %2127 = vrot.lane.b32.xlu0 %v2098, 96
      %v2128 = vpop.permute.xlu0 %2127
      %2129 = vrot.lane.b32.xlu0 %v2099, 96
      %v2130 = vpop.permute.xlu0 %2129
      %2131 = vrot.lane.b32.xlu0 %v2100, 96
      %v2132 = vpop.permute.xlu0 %2131
      %2133 = vrot.lane.b32.xlu0 %v2101, 96
      %v2134 = vpop.permute.xlu0 %2133
      %2135 = vrot.lane.b32.xlu0 %v2102, 96
      %v2136 = vpop.permute.xlu0 %2135
      %2137 = vrot.lane.b32.xlu0 %v2103, 96
      %v2138 = vpop.permute.xlu0 %2137
      %2139 = vrot.lane.b32.xlu0 %v2104, 96
      %v2140 = vpop.permute.xlu0 %2139
      %v2141 = vsel %vm1011, %v2118, %v2120
      %v2142 = vsel %vm1011, %v2120, %v2122
      %v2143 = vsel %vm1011, %v2124, %v2126
      %v2144 = vsel %vm1011, %v2126, %v2128
      %v2145 = vsel %vm1011, %v2130, %v2132
      %v2146 = vsel %vm1011, %v2132, %v2134
      %v2147 = vsel %vm1011, %v2136, %v2138
      %v2148 = vsel %vm1011, %v2138, %v2140
      %v2157 = vadd.f32 %v2085, %v2141
      %v2158 = vadd.f32 %v2086, %v2142
      %v2159 = vadd.f32 %v2087, %v2143
      %v2160 = vadd.f32 %v2088, %v2144
      %v2161 = vadd.f32 %v2089, %v2145
      %v2162 = vadd.f32 %v2090, %v2146
      %v2163 = vadd.f32 %v2091, %v2147
      %v2164 = vadd.f32 %v2092, %v2148
      %v2165 = vmul.f32 %v1685, %v1038
      %v2166 = vmul.f32 %v1669, %v1038
      %v2167 = vmul.f32 %v1689, %v1038
      %v2168 = vmul.f32 %v1686, %v1042
      %v2169 = vmul.f32 %v1670, %v1042
      %v2170 = vmul.f32 %v1690, %v1042
      %v2171 = vmul.f32 %v1687, %v1046
      %v2172 = vmul.f32 %v1671, %v1046
      %v2173 = vmul.f32 %v1691, %v1046
      %v2174 = vmul.f32 %v1688, %v1050
      %v2175 = vmul.f32 %v1672, %v1050
      %v2176 = vmul.f32 %v1692, %v1050
      %2189 = vrot.lane.b32.xlu0 %v2165, 95
      %v2190 = vpop.permute.xlu0 %2189
      %2191 = vrot.lane.b32.xlu0 %v2166, 95
      %v2192 = vpop.permute.xlu0 %2191
      %2193 = vrot.lane.b32.xlu0 %v2167, 95
      %v2194 = vpop.permute.xlu0 %2193
      %2195 = vrot.lane.b32.xlu0 %v2168, 95
      %v2196 = vpop.permute.xlu0 %2195
      %2197 = vrot.lane.b32.xlu0 %v2169, 95
      %v2198 = vpop.permute.xlu0 %2197
      %2199 = vrot.lane.b32.xlu0 %v2170, 95
      %v2200 = vpop.permute.xlu0 %2199
      %2201 = vrot.lane.b32.xlu0 %v2171, 95
      %v2202 = vpop.permute.xlu0 %2201
      %2203 = vrot.lane.b32.xlu0 %v2172, 95
      %v2204 = vpop.permute.xlu0 %2203
      %2205 = vrot.lane.b32.xlu0 %v2173, 95
      %v2206 = vpop.permute.xlu0 %2205
      %2207 = vrot.lane.b32.xlu0 %v2174, 95
      %v2208 = vpop.permute.xlu0 %2207
      %2209 = vrot.lane.b32.xlu0 %v2175, 95
      %v2210 = vpop.permute.xlu0 %2209
      %2211 = vrot.lane.b32.xlu0 %v2176, 95
      %v2212 = vpop.permute.xlu0 %2211
      %v2213 = vsel %vm1100, %v2190, %v2192
      %v2214 = vsel %vm1100, %v2192, %v2194
      %v2215 = vsel %vm1100, %v2196, %v2198
      %v2216 = vsel %vm1100, %v2198, %v2200
      %v2217 = vsel %vm1100, %v2202, %v2204
      %v2218 = vsel %vm1100, %v2204, %v2206
      %v2219 = vsel %vm1100, %v2208, %v2210
      %v2220 = vsel %vm1100, %v2210, %v2212
      %v2229 = vadd.f32 %v2157, %v2213
      %v2230 = vadd.f32 %v2158, %v2214
      %v2231 = vadd.f32 %v2159, %v2215
      %v2232 = vadd.f32 %v2160, %v2216
      %v2233 = vadd.f32 %v2161, %v2217
      %v2234 = vadd.f32 %v2162, %v2218
      %v2235 = vadd.f32 %v2163, %v2219
      %v2236 = vadd.f32 %v2164, %v2220
      %v2237 = vmul.f32 %v1705, %v1127
      %v2238 = vmul.f32 %v1706, %v1127
      %v2239 = vmul.f32 %v1707, %v1127
      %v2240 = vmul.f32 %v1708, %v1131
      %v2241 = vmul.f32 %v1709, %v1131
      %v2242 = vmul.f32 %v1710, %v1131
      %v2243 = vmul.f32 %v1711, %v1135
      %v2244 = vmul.f32 %v1712, %v1135
      %v2245 = vmul.f32 %v1713, %v1135
      %v2246 = vmul.f32 %v1714, %v1139
      %v2247 = vmul.f32 %v1715, %v1139
      %v2248 = vmul.f32 %v1716, %v1139
      %2261 = vrot.lane.b32.xlu0 %v2237, 94
      %v2262 = vpop.permute.xlu0 %2261
      %2263 = vrot.lane.b32.xlu0 %v2238, 94
      %v2264 = vpop.permute.xlu0 %2263
      %2265 = vrot.lane.b32.xlu0 %v2239, 94
      %v2266 = vpop.permute.xlu0 %2265
      %2267 = vrot.lane.b32.xlu0 %v2240, 94
      %v2268 = vpop.permute.xlu0 %2267
      %2269 = vrot.lane.b32.xlu0 %v2241, 94
      %v2270 = vpop.permute.xlu0 %2269
      %2271 = vrot.lane.b32.xlu0 %v2242, 94
      %v2272 = vpop.permute.xlu0 %2271
      %2273 = vrot.lane.b32.xlu0 %v2243, 94
      %v2274 = vpop.permute.xlu0 %2273
      %2275 = vrot.lane.b32.xlu0 %v2244, 94
      %v2276 = vpop.permute.xlu0 %2275
      %2277 = vrot.lane.b32.xlu0 %v2245, 94
      %v2278 = vpop.permute.xlu0 %2277
      %2279 = vrot.lane.b32.xlu0 %v2246, 94
      %v2280 = vpop.permute.xlu0 %2279
      %2281 = vrot.lane.b32.xlu0 %v2247, 94
      %v2282 = vpop.permute.xlu0 %2281
      %2283 = vrot.lane.b32.xlu0 %v2248, 94
      %v2284 = vpop.permute.xlu0 %2283
      %v2285 = vsel %vm1189, %v2262, %v2264
      %v2286 = vsel %vm1189, %v2264, %v2266
      %v2287 = vsel %vm1189, %v2268, %v2270
      %v2288 = vsel %vm1189, %v2270, %v2272
      %v2289 = vsel %vm1189, %v2274, %v2276
      %v2290 = vsel %vm1189, %v2276, %v2278
      %v2291 = vsel %vm1189, %v2280, %v2282
      %v2292 = vsel %vm1189, %v2282, %v2284
      %v2301 = vadd.f32 %v2229, %v2285
      %v2302 = vadd.f32 %v2230, %v2286
      %v2303 = vadd.f32 %v2231, %v2287
      %v2304 = vadd.f32 %v2232, %v2288
      %v2305 = vadd.f32 %v2233, %v2289
      %v2306 = vadd.f32 %v2234, %v2290
      %v2307 = vadd.f32 %v2235, %v2291
      %v2308 = vadd.f32 %v2236, %v2292
      %v2309 = vadd.f32 %v2301, %v1216
      %v2310 = vadd.f32 %v2302, %v1216
      %v2311 = vadd.f32 %v2303, %v1220
      %v2312 = vadd.f32 %v2304, %v1220
      %v2313 = vadd.f32 %v2305, %v1224
      %v2314 = vadd.f32 %v2306, %v1224
      %v2315 = vadd.f32 %v2307, %v1228
      %v2316 = vadd.f32 %v2308, %v1228
      %v2317 = vmul.f32 %v2309, %v2309
      %v2318 = vmul.f32 %v2310, %v2310
      %v2319 = vmul.f32 %v2311, %v2311
      %v2320 = vmul.f32 %v2312, %v2312
      %v2321 = vmul.f32 %v2313, %v2313
      %v2322 = vmul.f32 %v2314, %v2314
      %v2323 = vmul.f32 %v2315, %v2315
      %v2324 = vmul.f32 %v2316, %v2316
      %v2325 = vmul.f32 %v2309, %v2317
      %v2326 = vmul.f32 %v2310, %v2318
      %v2327 = vmul.f32 %v2311, %v2319
      %v2328 = vmul.f32 %v2312, %v2320
      %v2329 = vmul.f32 %v2313, %v2321
      %v2330 = vmul.f32 %v2314, %v2322
      %v2331 = vmul.f32 %v2315, %v2323
      %v2332 = vmul.f32 %v2316, %v2324
      %v2333 = vmul.f32 %v2325, 0.044715
      %v2334 = vmul.f32 %v2326, 0.044715
      %v2335 = vmul.f32 %v2327, 0.044715
      %v2336 = vmul.f32 %v2328, 0.044715
      %v2337 = vmul.f32 %v2329, 0.044715
      %v2338 = vmul.f32 %v2330, 0.044715
      %v2339 = vmul.f32 %v2331, 0.044715
      %v2340 = vmul.f32 %v2332, 0.044715
      %v2341 = vadd.f32 %v2309, %v2333
      %v2342 = vadd.f32 %v2310, %v2334
      %v2343 = vadd.f32 %v2311, %v2335
      %v2344 = vadd.f32 %v2312, %v2336
      %v2345 = vadd.f32 %v2313, %v2337
      %v2346 = vadd.f32 %v2314, %v2338
      %v2347 = vadd.f32 %v2315, %v2339
      %v2348 = vadd.f32 %v2316, %v2340
      %v2349 = vmul.f32 %v2341, 0.7978846
      %v2350 = vmul.f32 %v2342, 0.7978846
      %v2351 = vmul.f32 %v2343, 0.7978846
      %v2352 = vmul.f32 %v2344, 0.7978846
      %v2353 = vmul.f32 %v2345, 0.7978846
      %v2354 = vmul.f32 %v2346, 0.7978846
      %v2355 = vmul.f32 %v2347, 0.7978846
      %v2356 = vmul.f32 %v2348, 0.7978846
      %v2357 = vtanh.pop %v2349
      %v2358 = vtanh.pop %v2350
      %v2359 = vtanh.pop %v2351
      %v2360 = vtanh.pop %v2352
      %v2361 = vtanh.pop %v2353
      %v2362 = vtanh.pop %v2354
      %v2363 = vtanh.pop %v2355
      %v2364 = vtanh.pop %v2356
      %v2365 = vadd.f32 %v2357, 1.0
      %v2366 = vadd.f32 %v2358, 1.0
      %v2367 = vadd.f32 %v2359, 1.0
      %v2368 = vadd.f32 %v2360, 1.0
      %v2369 = vadd.f32 %v2361, 1.0
      %v2370 = vadd.f32 %v2362, 1.0
      %v2371 = vadd.f32 %v2363, 1.0
      %v2372 = vadd.f32 %v2364, 1.0
      %v2373 = vmul.f32 %v2365, 0.5
      %v2374 = vmul.f32 %v2366, 0.5
      %v2375 = vmul.f32 %v2367, 0.5
      %v2376 = vmul.f32 %v2368, 0.5
      %v2377 = vmul.f32 %v2369, 0.5
      %v2378 = vmul.f32 %v2370, 0.5
      %v2379 = vmul.f32 %v2371, 0.5
      %v2380 = vmul.f32 %v2372, 0.5
      %v2381 = vmul.f32 %v2309, %v2373
      %v2382 = vmul.f32 %v2310, %v2374
      %v2383 = vmul.f32 %v2311, %v2375
      %v2384 = vmul.f32 %v2312, %v2376
      %v2385 = vmul.f32 %v2313, %v2377
      %v2386 = vmul.f32 %v2314, %v2378
      %v2387 = vmul.f32 %v2315, %v2379
      %v2388 = vmul.f32 %v2316, %v2380
      %v2389 = vadd.f32 %v2381, %v2382
      %2390 = vadd.xlane.f32.xlu0 %v2389
      %v2391 = vpop.xlane.xlu0 %2390
      %v2392 = vadd.f32 %v2383, %v2384
      %2393 = vadd.xlane.f32.xlu0 %v2392
      %v2394 = vpop.xlane.xlu0 %2393
      %v2395 = vadd.f32 %v2385, %v2386
      %2396 = vadd.xlane.f32.xlu0 %v2395
      %v2397 = vpop.xlane.xlu0 %2396
      %v2398 = vadd.f32 %v2387, %v2388
      %2399 = vadd.xlane.f32.xlu0 %v2398
      %v2400 = vpop.xlane.xlu0 %2399
      %v2401 = vmul.f32 %v2391, %v1328
      %v2402 = vmul.f32 %v2394, %v1328
      %v2403 = vmul.f32 %v2397, %v1328
      %v2404 = vmul.f32 %v2400, %v1328
      %v2405 = vmul.f32 %v180, %v2401
      %v2406 = vmul.f32 %v181, %v2402
      %v2407 = vmul.f32 %v182, %v2403
      %v2408 = vmul.f32 %v183, %v2404
      %v2409 = vsel %vm1337, %v2405, 0.0
      %v2410 = vsel %vm1337, %v2406, 0.0
      %v2411 = vadd.f32 %v2409, %v2410
      %v2412 = vsel %vm1337, %v2407, 0.0
      %v2413 = vadd.f32 %v2411, %v2412
      %v2414 = vsel %vm1337, %v2408, 0.0
      %v2415 = vadd.f32 %v2413, %v2414
      %v2416 = vrot.slane %v2415, 4
      %v2417 = vadd.f32 %v2415, %v2416
      %v2418 = vrot.slane %v2417, 2
      %v2419 = vadd.f32 %v2417, %v2418
      %v2420 = vrot.slane %v2419, 1
      %v2421 = vadd.f32 %v2419, %v2420
      %v2422 = vmul.f32 %v2421, %v2421
      %v2423 = vmul.f32 %v2421, %v2422
      %v2424 = vmul.f32 %v2423, 0.044715
      %v2425 = vadd.f32 %v2421, %v2424
      %v2426 = vmul.f32 %v2425, 0.7978846
      %v2427 = vtanh.pop %v2426
      %v2428 = vadd.f32 %v2427, 1.0
      %v2429 = vmul.f32 %v2428, 0.5
      %v2430 = vmul.f32 %v2421, %v2429
      %2432 = vrot.lane.b32.xlu0 %v2430, 2
      %v2433 = vpop.permute.xlu0 %2432
      %v2435 = vmul.f32 %v180, %v2433
      %v2436 = vmul.f32 %v181, %v2433
      %v2437 = vmul.f32 %v182, %v2433
      %v2438 = vmul.f32 %v183, %v2433
      %2443 = vrot.lane.b32.xlu0 %v2435, 107
      %v2444 = vpop.permute.xlu0 %2443
      %2445 = vrot.lane.b32.xlu0 %v2436, 107
      %v2446 = vpop.permute.xlu0 %2445
      %2447 = vrot.lane.b32.xlu0 %v2437, 107
      %v2448 = vpop.permute.xlu0 %2447
      %2449 = vrot.lane.b32.xlu0 %v2438, 107
      %v2450 = vpop.permute.xlu0 %2449
      %v2455 = vsel %vm1384, %v2444, 0.0
      %2456 = vadd.xlane.f32.xlu0 %v2455
      %v2457 = vpop.xlane.xlu0 %2456
      %v2458 = vsel %vm1384, %v2446, 0.0
      %2459 = vadd.xlane.f32.xlu0 %v2458
      %v2460 = vpop.xlane.xlu0 %2459
      %v2461 = vsel %vm1384, %v2448, 0.0
      %2462 = vadd.xlane.f32.xlu0 %v2461
      %v2463 = vpop.xlane.xlu0 %2462
      %v2464 = vsel %vm1384, %v2450, 0.0
      %2465 = vadd.xlane.f32.xlu0 %v2464
      %v2466 = vpop.xlane.xlu0 %2465
      %v2467 = vxor.u32 %v2457, 2147483648
      %v2468 = vxor.u32 %v2460, 2147483648
      %v2469 = vxor.u32 %v2463, 2147483648
      %v2470 = vxor.u32 %v2466, 2147483648
      %v2471 = vmul.f32 %v2467, 1.442695
      %v2472 = vpow.pop %v2471
      %v2473 = vmul.f32 %v2468, 1.442695
      %v2474 = vpow.pop %v2473
      %v2475 = vmul.f32 %v2469, 1.442695
      %v2476 = vpow.pop %v2475
      %v2477 = vmul.f32 %v2470, 1.442695
      %v2478 = vpow.pop %v2477
      %v2479 = vadd.f32 %v2472, 1.0
      %v2480 = vadd.f32 %v2474, 1.0
      %v2481 = vadd.f32 %v2476, 1.0
      %v2482 = vadd.f32 %v2478, 1.0
      %v2483 = vrcp.pop %v2479
      %v2484 = vmul.f32 %v2479, %v2483
      %v2485 = vsub.f32 1.0, %v2484
      %v2486 = vmul.f32 %v2483, %v2485
      %v2487 = vadd.f32 %v2483, %v2486
      %vm2488 = vweird.f32 %v2479
      %vm2489 = vweird.f32 %v2483
      %vm2490 = vmor %vm2488, %vm2489
      %v2491 = vsel %vm2490, %v2483, %v2487
      %v2492 = vand.u32 2147483647, %v2479
      %vm2493 = vcmp.eq.f32.partialorder %v2492, 8.507059e+37
      %v2494 = vand.u32 %v2479, 2147483648
      %v2495 = vor.u32 1.1754944e-38, %v2494
      %v2496 = vsel %vm2493, %v2495, %v2491
      %v2497 = vmul.f32 1.0, %v2496
      %v2498 = vrcp.pop %v2480
      %v2499 = vmul.f32 %v2480, %v2498
      %v2500 = vsub.f32 1.0, %v2499
      %v2501 = vmul.f32 %v2498, %v2500
      %v2502 = vadd.f32 %v2498, %v2501
      %vm2503 = vweird.f32 %v2480
      %vm2504 = vweird.f32 %v2498
      %vm2505 = vmor %vm2503, %vm2504
      %v2506 = vsel %vm2505, %v2498, %v2502
      %v2507 = vand.u32 2147483647, %v2480
      %vm2508 = vcmp.eq.f32.partialorder %v2507, 8.507059e+37
      %v2509 = vand.u32 %v2480, 2147483648
      %v2510 = vor.u32 1.1754944e-38, %v2509
      %v2511 = vsel %vm2508, %v2510, %v2506
      %v2512 = vmul.f32 1.0, %v2511
      %v2513 = vrcp.pop %v2481
      %v2514 = vmul.f32 %v2481, %v2513
      %v2515 = vsub.f32 1.0, %v2514
      %v2516 = vmul.f32 %v2513, %v2515
      %v2517 = vadd.f32 %v2513, %v2516
      %vm2518 = vweird.f32 %v2481
      %vm2519 = vweird.f32 %v2513
      %vm2520 = vmor %vm2518, %vm2519
      %v2521 = vsel %vm2520, %v2513, %v2517
      %v2522 = vand.u32 2147483647, %v2481
      %vm2523 = vcmp.eq.f32.partialorder %v2522, 8.507059e+37
      %v2524 = vand.u32 %v2481, 2147483648
      %v2525 = vor.u32 1.1754944e-38, %v2524
      %v2526 = vsel %vm2523, %v2525, %v2521
      %v2527 = vmul.f32 1.0, %v2526
      %v2528 = vrcp.pop %v2482
      %v2529 = vmul.f32 %v2482, %v2528
      %v2530 = vsub.f32 1.0, %v2529
      %v2531 = vmul.f32 %v2528, %v2530
      %v2532 = vadd.f32 %v2528, %v2531
      %vm2533 = vweird.f32 %v2482
      %vm2534 = vweird.f32 %v2528
      %vm2535 = vmor %vm2533, %vm2534
      %v2536 = vsel %vm2535, %v2528, %v2532
      %v2537 = vand.u32 2147483647, %v2482
      %vm2538 = vcmp.eq.f32.partialorder %v2537, 8.507059e+37
      %v2539 = vand.u32 %v2482, 2147483648
      %v2540 = vor.u32 1.1754944e-38, %v2539
      %v2541 = vsel %vm2538, %v2540, %v2536
      %v2542 = vmul.f32 1.0, %v2541
      %v2543 = vmul.f32 %v2381, %v2497
      %v2544 = vmul.f32 %v2382, %v2497
      %v2545 = vmul.f32 %v2383, %v2512
      %v2546 = vmul.f32 %v2384, %v2512
      %v2547 = vmul.f32 %v2385, %v2527
      %v2548 = vmul.f32 %v2386, %v2527
      %v2549 = vmul.f32 %v2387, %v2542
      %v2550 = vmul.f32 %v2388, %v2542
      %v2551 = vpack.c.bf16 %v2545, %v2543
      %v2552 = vpack.c.bf16 %v2546, %v2544
      %v2553 = vpack.c.bf16 %v2549, %v2547
      %v2554 = vpack.c.bf16 %v2550, %v2548
      %2555 = vmatpush.bf16.msra.mxu0 0
      %2556 = vmatpush.bf16.msra.mxu0 0
      %2557 = vmatpush.bf16.msra.mxu0 0
      %2558 = vmatpush.bf16.msra.mxu0 0
      %2559 = vmatpush.bf16.msra.mxu0 0
      %2560 = vmatpush.bf16.msra.mxu0 0
      %2561 = vmatpush.bf16.msra.mxu0 %v2553
      %2562 = vmatpush.bf16.msra.mxu0 %v2551
      %2563 = vmatmul.bf16.gmra.mxu0 %v1492
      %v2564 = vpop.f32.mrf.mxu0
      %v2565 = vadd.f32 %v1488, %v2564
      %v2566 = vpop.f32.mrf.mxu0
      %2567 = vdwg.mxu0
      %2568 = vmatpush.bf16.msra.mxu0 0
      %2569 = vmatpush.bf16.msra.mxu0 0
      %2570 = vmatpush.bf16.msra.mxu0 0
      %2571 = vmatpush.bf16.msra.mxu0 0
      %2572 = vmatpush.bf16.msra.mxu0 0
      %2573 = vmatpush.bf16.msra.mxu0 0
      %2574 = vmatpush.bf16.msra.mxu0 %v2554
      %2575 = vmatpush.bf16.msra.mxu0 %v2552
      %2576 = vmatmul.bf16.gmra.mxu0 %v1492
      %v2577 = vpop.f32.mrf.mxu0
      %v2578 = vadd.f32 %v1488, %v2577
      %v2579 = vpop.f32.mrf.mxu0
      %2580 = vdwg.mxu0
      %v2581 = vadd.f32 %v1525, %v2565
      %v2582 = vadd.f32 %v1526, %v2578
      %s2583 = scalar_lea.vmem %s177, 16
      %2584 = vst [vmem:[%s2583] sm:$0xff] %v2581
      %2585 = vst [vmem:[%s2583 + $0x8] sm:$0xff] %v2582
      %s2586 = smul.u32 2, %s14
      %p2587 = scmp.lt.s32.totalorder %s2586, 3
      %s2588 = scalar_select %p2587, %s2586, 3
      %s2589 = smul.addr %s2588, 2
      %s2590 = smul.addr %s2589, 8
      %s2591 = scalar_lea.vmem %s3, %s2590
      // Predicated region
      $region33: #{mbconv_forward.1} parent=31 // pred_check
        %p2592 = pneg %p100
      $region34: #{mbconv_forward.1} parent=31 // pred_check_branch
        %2594 = sbr.rel (%p2592) target = $region36
      $region35: #{mbconv_forward.1} parent=31 // pred_region
        %s2595 = smul.u32 2, %s14
      $region36: #{mbconv_forward.1} parent=31 // pred_fallthru
        _
    $region32: #{mbconv_forward.1} parent=5 // pred_fallthru
      _
    %p2596 = scmp.le.s32.totalorder 2, %s9
    // Predicated region
    $region37: #{mbconv_forward.1} parent=5 // pred_check
      %p2597 = pneg %p2596
    $region38: #{mbconv_forward.1} parent=5 // pred_check_branch
      %2599 = sbr.rel (%p2597) target = $region40
    $region39: #{mbconv_forward.1} parent=5 // pred_region
      %s2600 = ssub.s32 %s9, 2
      // Predicated region
      $region41: #{mbconv_forward.1} parent=39 // pred_check
        %p2601 = pneg %p106
      $region42: #{mbconv_forward.1} parent=39 // pred_check_branch
        %2603 = sbr.rel (%p2601) target = $region44
      $region43: #{mbconv_forward.1} parent=39 // pred_region
        %s2604 = smul.u32 2, %s15
        %p2605 = scmp.lt.s32.totalorder %s2604, 3
        %s2606 = scalar_select %p2605, %s2604, 3
        %s2607 = smul.addr %s2606, 2
        %s2608 = smul.addr %s2607, 8
        %s2609 = scalar_lea.vmem %s3, %s2608
      $region44: #{mbconv_forward.1} parent=39 // pred_fallthru
        _
    $region40: #{mbconv_forward.1} parent=5 // pred_fallthru
      _
  $region6: #{mbconv_forward.1} parent=0 // loop_footer
    %s13 = sadd.s32 1, %s9
  $region7: #{mbconv_forward.1} parent=0 // loop_footer_branch
    %8 = sbr.rel target = $region3
  $region8: #{mbconv_forward.1} parent=0 // loop_exit
    _

</llo_original>
